<compile_context>
chip_gen: v6e
topology: v6e:2x2x1
jax: 0.10.0
libtpu: 0.0.40
codegen_flags: <defaults>
</compile_context>

<pallas_src>
import functools

import jax
import jax.numpy as jnp
from jax.experimental import pallas as pl
from jax.experimental.pallas import tpu as pltpu

LN_EPS = 1e-5


def _cdiv(a, b):
    return -(-a // b)


def _gconv_kernel(adjT_ref, x_ref, wt_ref, mavg_ref, b_ref, g_ref, beta_ref,
                  o_ref, *, order):
    # adjT_ref : (1, R, R)   block-diagonal transposed adjacency, R = Bn*V
    # x_ref    : (1, R, CL)  activations, CL = C*L (nodes on sublanes,
    #                        channel*feature lane-dense on lanes)
    # wt_ref   : (CL, CL)    block-diagonal Linear weight  kron(I_C, W^T)
    # mavg_ref : (CL, CL)    block-averaging matrix        kron(I_C, 1/L)
    # b/g/beta : (1, CL)     bias / LayerNorm gamma, beta tiled across C
    # o_ref    : (1, R, CL)
    adjT = adjT_ref[0]
    x = x_ref[0]

    # ---- graph propagation: one block-diagonal MXU matmul per hop ----------
    h = x
    for _ in range(order):
        h = jnp.dot(adjT, h, preferred_element_type=jnp.float32)

    # ---- residual + block-diagonal Linear (single MXU matmul) --------------
    # TODO(synk): dropout (p=0.1) omitted — eval-mode identity.
    y = x + jnp.dot(h, wt_ref[...], preferred_element_type=jnp.float32) + b_ref[...]

    # ---- LayerNorm over each L-block; reductions on the MXU (exact) --------
    mean = jnp.dot(y, mavg_ref[...], preferred_element_type=jnp.float32)
    d = y - mean
    var = jnp.dot(d * d, mavg_ref[...], preferred_element_type=jnp.float32)
    yn = d * jax.lax.rsqrt(var + LN_EPS)

    # ---- single lane-dense full-width store ---------------------------------
    o_ref[0] = (yn * g_ref[...] + beta_ref[...]).astype(o_ref.dtype)


def _choose_bn(N, V, target_rows=128):
    """Pick Bn so Bn*V fills ~128 MXU rows, keeping >=2 grid steps if possible."""
    bn = max(1, target_rows // V)
    bn = min(bn, N)
    while bn > 1 and _cdiv(N, bn) < 2:
        bn //= 2
    return max(bn, 1)


def gconv_forward(dynadj, x, W, b, gamma, beta, *, order=2, bn=None):
    """x: (N, C, V, L) float32, dynadj: (N, V, V) float32 -> (N, C, V, L)."""
    N, C, V, L = x.shape
    CL = C * L
    if bn is None:
        bn = _choose_bn(N, V)
    G = _cdiv(N, bn)
    Npad = G * bn
    R = bn * V

    # ----- relayout NCVL -> (G, Bn*V, C*L) slabs -----------------------------
    # TODO(synk): if the surrounding model produces/consumes the (N, V, C*L)
    # layout natively, these two extra HBM transpose passes disappear.
    x_vcl = jnp.transpose(x, (0, 2, 1, 3)).reshape(N, V, CL)
    adjT = jnp.transpose(dynadj, (0, 2, 1))
    if Npad != N:
        x_vcl = jnp.pad(x_vcl, ((0, Npad - N), (0, 0), (0, 0)))
        adjT = jnp.pad(adjT, ((0, Npad - N), (0, 0), (0, 0)))
    x_slab = x_vcl.reshape(G, R, CL)

    # Block-diagonal adjacency per group (zero off-diagonal blocks -> graphs
    # from different batch elements never mix).
    eye_bn = jnp.eye(bn, dtype=adjT.dtype)
    adjT_bd = (adjT.reshape(G, bn, V, V)[:, :, :, None, :]
               * eye_bn[None, :, None, :, None]).reshape(G, R, R)

    # Block-diagonal Linear weight, averaging matrix, pre-tiled vectors.
    eye_c = jnp.eye(C, dtype=W.dtype)
    wt_bd = jnp.kron(eye_c, jnp.transpose(W))                     # (CL, CL)
    mavg_bd = jnp.kron(eye_c, jnp.full((L, L), 1.0 / L, W.dtype))  # (CL, CL)
    b_t = jnp.tile(b, C).reshape(1, CL)
    g_t = jnp.tile(gamma, C).reshape(1, CL)
    beta_t = jnp.tile(beta, C).reshape(1, CL)

    kernel = functools.partial(_gconv_kernel, order=order)

    flops_per_step = 2 * R * R * CL * order + 3 * (2 * R * CL * CL)
    cost = pl.CostEstimate(
        flops=int(G * flops_per_step),
        transcendentals=int(G * R * CL),
        bytes_accessed=int(4 * (adjT_bd.size + 2 * x_slab.size
                                + wt_bd.size + mavg_bd.size + 3 * CL)),
    )

    out_slab = pl.pallas_call(
        kernel,
        out_shape=jax.ShapeDtypeStruct((G, R, CL), x.dtype),
        grid_spec=pltpu.PrefetchScalarGridSpec(
            num_scalar_prefetch=0,
            grid=(G,),
            in_specs=[
                pl.BlockSpec((1, R, R), lambda g: (g, 0, 0)),
                pl.BlockSpec((1, R, CL), lambda g: (g, 0, 0)),
                pl.BlockSpec((CL, CL), lambda g: (0, 0)),
                pl.BlockSpec((CL, CL), lambda g: (0, 0)),
                pl.BlockSpec((1, CL), lambda g: (0, 0)),
                pl.BlockSpec((1, CL), lambda g: (0, 0)),
                pl.BlockSpec((1, CL), lambda g: (0, 0)),
            ],
            out_specs=pl.BlockSpec((1, R, CL), lambda g: (g, 0, 0)),
        ),
        compiler_params=pltpu.CompilerParams(
            dimension_semantics=("parallel",)),
        cost_estimate=cost,
    )(adjT_bd, x_slab, wt_bd, mavg_bd, b_t, g_t, beta_t)

    out = out_slab.reshape(Npad, V, C, L)[:N]
    return jnp.transpose(out, (0, 2, 1, 3))


def gconv_reference(dynadj, x, W, b, gamma, beta, *, order=2):
    """Pure-JAX reference matching the PyTorch forward (dropout = identity)."""
    res = x
    h = x
    for _ in range(order):
        h = jnp.einsum('ncvl,nvw->ncwl', h, dynadj)
    y = res + (jnp.einsum('ncvl,ol->ncvo', h, W) + b)
    mean = jnp.mean(y, axis=-1, keepdims=True)
    var = jnp.mean((y - mean) ** 2, axis=-1, keepdims=True)
    return (y - mean) * jax.lax.rsqrt(var + LN_EPS) * gamma + beta


if __name__ == "__main__":
    ORDER = 2

    key = jax.random.PRNGKey(0)
    kx, ka, kw, kb = jax.random.split(key, 4)

    # Main case: batch 32, channels 4, nodes 8, in_dim 32.
    # Bn auto-picks 16 -> slabs of 128 rows x 128 lanes, grid of 2 steps.
    N, C, V, L = 32, 4, 8, 32
    x = jax.random.normal(kx, (N, C, V, L), dtype=jnp.float32)
    dynadj = jax.nn.softmax(
        jax.random.normal(ka, (N, V, V), dtype=jnp.float32), axis=-1)

    bound = 1.0 / (L ** 0.5)
    W = jax.random.uniform(kw, (L, L), jnp.float32, -bound, bound)
    b = jax.random.uniform(kb, (L,), jnp.float32, -bound, bound)
    gamma = jnp.ones((L,), jnp.float32)
    beta = jnp.zeros((L,), jnp.float32)

    out = gconv_forward(dynadj, x, W, b, gamma, beta, order=ORDER)
    out = jax.block_until_ready(out)
    ref = gconv_reference(dynadj, x, W, b, gamma, beta, order=ORDER)
    assert out.shape == (N, C, V, L)
    assert jnp.allclose(out, ref, atol=1e-4, rtol=1e-4)

    # Secondary case: ragged batch with explicit Bn to exercise padding.
    N2 = 5
    x2 = jax.random.normal(kx, (N2, C, V, L), dtype=jnp.float32)
    dynadj2 = jax.nn.softmax(
        jax.random.normal(ka, (N2, V, V), dtype=jnp.float32), axis=-1)
    out2 = gconv_forward(dynadj2, x2, W, b, gamma, beta, order=ORDER, bn=2)
    out2 = jax.block_until_ready(out2)
    ref2 = gconv_reference(dynadj2, x2, W, b, gamma, beta, order=ORDER)
    assert out2.shape == (N2, C, V, L)
    assert jnp.allclose(out2, ref2, atol=1e-4, rtol=1e-4)

    print("KERNEL_OK")
</pallas_src>

<mosaic_0001>
module attributes {stable_mosaic.version = 11 : i64} {
  func.func @_gconv_kernel(%arg0: i32, %arg1: memref<1x128x128xf32, #tpu.memory_space<vmem>>, %arg2: memref<1x128x128xf32, #tpu.memory_space<vmem>>, %arg3: memref<128x128xf32, #tpu.memory_space<vmem>>, %arg4: memref<128x128xf32, #tpu.memory_space<vmem>>, %arg5: memref<1x128xf32, #tpu.memory_space<vmem>>, %arg6: memref<1x128xf32, #tpu.memory_space<vmem>>, %arg7: memref<1x128xf32, #tpu.memory_space<vmem>>, %arg8: memref<1x128x128xf32, #tpu.memory_space<vmem>>) attributes {dimension_semantics = [#tpu.dimension_semantics<parallel>], iteration_bounds = array<i64: 2>, scalar_prefetch = 0 : i64, scratch_operands = 0 : i64, tpu.core_type = #tpu.core_type<tc>, window_params = [{transform_indices = @transform_0, window_bounds = array<i64: 1, 128, 128>}, {transform_indices = @transform_1, window_bounds = array<i64: 1, 128, 128>}, {pipeline_mode = #tpu.pipeline_mode<synchronous>, transform_indices = @transform_2, window_bounds = array<i64: 128, 128>}, {pipeline_mode = #tpu.pipeline_mode<synchronous>, transform_indices = @transform_3, window_bounds = array<i64: 128, 128>}, {pipeline_mode = #tpu.pipeline_mode<synchronous>, transform_indices = @transform_4, window_bounds = array<i64: 1, 128>}, {pipeline_mode = #tpu.pipeline_mode<synchronous>, transform_indices = @transform_5, window_bounds = array<i64: 1, 128>}, {pipeline_mode = #tpu.pipeline_mode<synchronous>, transform_indices = @transform_6, window_bounds = array<i64: 1, 128>}, {transform_indices = @transform_7, window_bounds = array<i64: 1, 128, 128>}]} {
    %c0 = arith.constant 0 : index
    %c0_0 = arith.constant 0 : index
    %c0_1 = arith.constant 0 : index
    %0 = vector.load %arg1[%c0, %c0_0, %c0_1] : memref<1x128x128xf32, #tpu.memory_space<vmem>>, vector<1x128x128xf32>
    %1 = vector.shape_cast %0 : vector<1x128x128xf32> to vector<128x128xf32>
    %c0_2 = arith.constant 0 : index
    %c0_3 = arith.constant 0 : index
    %c0_4 = arith.constant 0 : index
    %2 = vector.load %arg2[%c0_2, %c0_3, %c0_4] : memref<1x128x128xf32, #tpu.memory_space<vmem>>, vector<1x128x128xf32>
    %3 = vector.shape_cast %2 : vector<1x128x128xf32> to vector<128x128xf32>
    %cst = arith.constant dense<0.000000e+00> : vector<128x128xf32>
    %4 = tpu.matmul %1, %3, %cst {dimension_numbers = #tpu.dot_dimension_numbers<[1], [0], [0], [1], [0, 0, 1, 1], [], []>} : vector<128x128xf32>, vector<128x128xf32>, vector<128x128xf32> -> vector<128x128xf32>
    %cst_5 = arith.constant dense<0.000000e+00> : vector<128x128xf32>
    %5 = tpu.matmul %1, %4, %cst_5 {dimension_numbers = #tpu.dot_dimension_numbers<[1], [0], [0], [1], [0, 0, 1, 1], [], []>} : vector<128x128xf32>, vector<128x128xf32>, vector<128x128xf32> -> vector<128x128xf32>
    %c0_6 = arith.constant 0 : index
    %c0_7 = arith.constant 0 : index
    %6 = vector.load %arg3[%c0_6, %c0_7] : memref<128x128xf32, #tpu.memory_space<vmem>>, vector<128x128xf32>
    %cst_8 = arith.constant dense<0.000000e+00> : vector<128x128xf32>
    %7 = tpu.matmul %5, %6, %cst_8 {dimension_numbers = #tpu.dot_dimension_numbers<[1], [0], [0], [1], [0, 0, 1, 1], [], []>} : vector<128x128xf32>, vector<128x128xf32>, vector<128x128xf32> -> vector<128x128xf32>
    %8 = arith.addf %3, %7 : vector<128x128xf32>
    %c0_9 = arith.constant 0 : index
    %c0_10 = arith.constant 0 : index
    %9 = vector.load %arg5[%c0_9, %c0_10] : memref<1x128xf32, #tpu.memory_space<vmem>>, vector<1x128xf32>
    %10 = vector.broadcast %9 : vector<1x128xf32> to vector<128x128xf32>
    %11 = arith.addf %8, %10 : vector<128x128xf32>
    %c0_11 = arith.constant 0 : index
    %c0_12 = arith.constant 0 : index
    %12 = vector.load %arg4[%c0_11, %c0_12] : memref<128x128xf32, #tpu.memory_space<vmem>>, vector<128x128xf32>
    %cst_13 = arith.constant dense<0.000000e+00> : vector<128x128xf32>
    %13 = tpu.matmul %11, %12, %cst_13 {dimension_numbers = #tpu.dot_dimension_numbers<[1], [0], [0], [1], [0, 0, 1, 1], [], []>} : vector<128x128xf32>, vector<128x128xf32>, vector<128x128xf32> -> vector<128x128xf32>
    %14 = arith.subf %11, %13 : vector<128x128xf32>
    %15 = arith.mulf %14, %14 : vector<128x128xf32>
    %c0_14 = arith.constant 0 : index
    %c0_15 = arith.constant 0 : index
    %16 = vector.load %arg4[%c0_14, %c0_15] : memref<128x128xf32, #tpu.memory_space<vmem>>, vector<128x128xf32>
    %cst_16 = arith.constant dense<0.000000e+00> : vector<128x128xf32>
    %17 = tpu.matmul %15, %16, %cst_16 {dimension_numbers = #tpu.dot_dimension_numbers<[1], [0], [0], [1], [0, 0, 1, 1], [], []>} : vector<128x128xf32>, vector<128x128xf32>, vector<128x128xf32> -> vector<128x128xf32>
    %cst_17 = arith.constant 9.99999974E-6 : f32
    %18 = vector.broadcast %cst_17 : f32 to vector<128x128xf32>
    %19 = arith.addf %17, %18 : vector<128x128xf32>
    %20 = math.rsqrt %19 : vector<128x128xf32>
    %21 = arith.mulf %14, %20 : vector<128x128xf32>
    %c0_18 = arith.constant 0 : index
    %c0_19 = arith.constant 0 : index
    %22 = vector.load %arg6[%c0_18, %c0_19] : memref<1x128xf32, #tpu.memory_space<vmem>>, vector<1x128xf32>
    %23 = vector.broadcast %22 : vector<1x128xf32> to vector<128x128xf32>
    %24 = arith.mulf %21, %23 : vector<128x128xf32>
    %c0_20 = arith.constant 0 : index
    %c0_21 = arith.constant 0 : index
    %25 = vector.load %arg7[%c0_20, %c0_21] : memref<1x128xf32, #tpu.memory_space<vmem>>, vector<1x128xf32>
    %26 = vector.broadcast %25 : vector<1x128xf32> to vector<128x128xf32>
    %27 = arith.addf %24, %26 : vector<128x128xf32>
    %c0_22 = arith.constant 0 : index
    %c0_23 = arith.constant 0 : index
    %c0_24 = arith.constant 0 : index
    %28 = vector.load %arg8[%c0_22, %c0_23, %c0_24] : memref<1x128x128xf32, #tpu.memory_space<vmem>>, vector<1x128x128xf32>
    %29 = vector.shape_cast %28 : vector<1x128x128xf32> to vector<128x128xf32>
    %30 = vector.shape_cast %27 : vector<128x128xf32> to vector<1x128x128xf32>
    tpu.vector_store %arg8[%c0_22, %c0_23, %c0_24], %30 {strides = array<i32>} : memref<1x128x128xf32, #tpu.memory_space<vmem>>, vector<1x128x128xf32>,
    return
  }
  func.func @transform_0(%arg0: i32) -> (i32, i32, i32) {
    %c0_i32 = arith.constant 0 : i32
    %c0_i32_0 = arith.constant 0 : i32
    %c0_i32_1 = arith.constant 0 : i32
    return %arg0, %c0_i32, %c0_i32_0 : i32, i32, i32
  }
  func.func @transform_1(%arg0: i32) -> (i32, i32, i32) {
    %c0_i32 = arith.constant 0 : i32
    %c0_i32_0 = arith.constant 0 : i32
    %c0_i32_1 = arith.constant 0 : i32
    return %arg0, %c0_i32, %c0_i32_0 : i32, i32, i32
  }
  func.func @transform_2(%arg0: i32) -> (i32, i32) {
    %c0_i32 = arith.constant 0 : i32
    %c0_i32_0 = arith.constant 0 : i32
    %c0_i32_1 = arith.constant 0 : i32
    return %c0_i32, %c0_i32_0 : i32, i32
  }
  func.func @transform_3(%arg0: i32) -> (i32, i32) {
    %c0_i32 = arith.constant 0 : i32
    %c0_i32_0 = arith.constant 0 : i32
    %c0_i32_1 = arith.constant 0 : i32
    return %c0_i32, %c0_i32_0 : i32, i32
  }
  func.func @transform_4(%arg0: i32) -> (i32, i32) {
    %c0_i32 = arith.constant 0 : i32
    %c0_i32_0 = arith.constant 0 : i32
    %c0_i32_1 = arith.constant 0 : i32
    return %c0_i32, %c0_i32_0 : i32, i32
  }
  func.func @transform_5(%arg0: i32) -> (i32, i32) {
    %c0_i32 = arith.constant 0 : i32
    %c0_i32_0 = arith.constant 0 : i32
    %c0_i32_1 = arith.constant 0 : i32
    return %c0_i32, %c0_i32_0 : i32, i32
  }
  func.func @transform_6(%arg0: i32) -> (i32, i32) {
    %c0_i32 = arith.constant 0 : i32
    %c0_i32_0 = arith.constant 0 : i32
    %c0_i32_1 = arith.constant 0 : i32
    return %c0_i32, %c0_i32_0 : i32, i32
  }
  func.func @transform_7(%arg0: i32) -> (i32, i32, i32) {
    %c0_i32 = arith.constant 0 : i32
    %c0_i32_0 = arith.constant 0 : i32
    %c0_i32_1 = arith.constant 0 : i32
    return %arg0, %c0_i32, %c0_i32_0 : i32, i32, i32
  }
}

</mosaic_0001>

<llo_original>
// kernel: tpu_custom_call.1
$region0: #{tpu_custom_call.1}
  #allocation0 [shape = 'u32[]', space=smem, size = 0x4, offset = 0x4, fixed_abs, tag = 'smem constant byte address 0x4 - core index']
  #allocation1 [shape = 'u32[144,128]{1,0:T(1,128)}', space=vmem, size = 0x12000, scoped, tag = 'internal scratch']
  %s0 = inlined_call_operand.hbm [shape: f32[2,128,128], index: 0, kind: input, shape index: {}]
  %s1 = inlined_call_operand.hbm [shape: f32[2,128,128], index: 1, kind: input, shape index: {}]
  %s2 = inlined_call_operand.hbm [shape: f32[128,128], index: 2, kind: input, shape index: {}]
  %s3 = inlined_call_operand.hbm [shape: f32[128,128], index: 3, kind: input, shape index: {}]
  %s4 = inlined_call_operand.vmem [shape: f32[1,128], index: 4, kind: input, shape index: {}]
  %s5 = inlined_call_operand.vmem [shape: f32[1,128], index: 5, kind: input, shape index: {}]
  %s6 = inlined_call_operand.vmem [shape: f32[1,128], index: 6, kind: input, shape index: {}]
  %s7 = inlined_call_operand.hbm [shape: f32[2,128,128], index: 7, kind: output, shape index: {}]
  %s8 = sld [smem:[#allocation0]]
  $region77: #{tpu_custom_call.1} parent=0
    _
  %s10 = ssub.s32 1, %s8
  %s11 = scalar_select 0, %s10, %s8
  $region1: #{tpu_custom_call.1} parent=0
    #allocation2 [shape = 'u8[131072]{0}', space=vmem, size = 0x20000, scoped, tag = 'input window, operand 0']
    #allocation3 [shape = 's32[2]{0}', space=sflag, size = 0x8, scoped, tag = 'scoped memory for tpu_custom_call.1']
    #allocation4 [shape = 's32[2]{0}', space=sflag, size = 0x8, scoped, tag = 'scoped memory for tpu_custom_call.1']
    #allocation5 [shape = 'u8[131072]{0}', space=vmem, size = 0x20000, scoped, tag = 'input window, operand 1']
    #allocation6 [shape = 's32[2]{0}', space=sflag, size = 0x8, scoped, tag = 'scoped memory for tpu_custom_call.1']
    #allocation7 [shape = 'u8[65536]{0}', space=vmem, size = 0x10000, scoped, tag = 'input window, operand 2, single buffered']
    #allocation8 [shape = 'u8[65536]{0}', space=vmem, size = 0x10000, scoped, tag = 'input window, operand 3, single buffered']
    #allocation9 [shape = 's32[1]{0}', space=sflag, size = 0x4, scoped, tag = 'scoped memory for tpu_custom_call.1']
    #allocation10 [shape = 'u8[131072]{0}', space=vmem, size = 0x20000, scoped, tag = 'output window, operand 0']
    %12 = vsyncpa [#allocation3], 0
    %s13 = scalar_lea.sflag [#allocation3], 1
    %14 = vsyncpa %s13, 0
    %15 = vsyncpa [#allocation6], 0
    %s16 = scalar_lea.sflag [#allocation6], 1
    %17 = vsyncpa %s16, 0
    %18 = vsyncpa [#allocation9], 0
    %19 = vsyncpa [#allocation4], 0
    %s20 = scalar_lea.sflag [#allocation4], 1
    %21 = vsyncpa %s20, 0
    loop: start=0, step=1, limit=4
    $region2: #{tpu_custom_call.1} parent=1 // loop_pre_header
      _
    $region3: #{tpu_custom_call.1} parent=1 // loop_header
      %s23 = sphi 0, %s27
      %p24 = scmp.ge.s32.totalorder %s23, 4
      %s33 = sphi 0, %s35
      %s36 = sphi 0, %s33
      %s37 = sphi 0, %s36
      %s53 = sphi 0, %s37
      %s59 = sphi 0, %s61
      %s62 = sphi 0, %s59
      %s63 = sphi 0, %s62
      %s79 = sphi 0, %s63
      %s83 = sphi 0, %s83
      %s85 = sphi 0, %s83
      %s86 = sphi 0, %s85
      %s100 = sphi 0, %s86
      %s104 = sphi 0, %s104
      %s106 = sphi 0, %s104
      %s107 = sphi 0, %s106
      %s121 = sphi 0, %s107
      %s125 = sphi 0, %s125
      %s127 = sphi 0, %s125
      %s128 = sphi 0, %s127
      %s142 = sphi 0, %s128
      %s146 = sphi 0, %s146
      %s148 = sphi 0, %s146
      %s149 = sphi 0, %s148
      %s163 = sphi 0, %s149
      %s167 = sphi 0, %s167
      %s169 = sphi 0, %s167
      %s170 = sphi 0, %s169
      %s184 = sphi 0, %s170
      %s190 = sphi 0, %s192
      %s193 = sphi 0, %s190
      %s194 = sphi 0, %s193
      %s210 = sphi 0, %s194
    $region4: #{tpu_custom_call.1} parent=1 // loop_header_branch
      %26 = sbr.rel (%p24) target = $region8
    $region5: #{tpu_custom_call.1} parent=1 // loop_body
      %s28 = ssub.s32 %s23, 1
      %s29 = ssub.s32 %s23, 2
      %s30 = sadd.s32 %s23, 1
      %s31 = ssub.s32 %s23, %s30
      %p32 = scmp.eq.s32.totalorder %s31, 0
      %s34 = sadd.s32 %s33, 1
      %s35 = scalar_select %p32, %s33, %s34
      %p38 = pneg %p32
      %p39 = scmp.eq.s32.totalorder %s23, 1
      %p40 = por %p38, %p39
      %p41 = scmp.ne.s32.totalorder %s33, %s36
      %p42 = scmp.eq.s32.totalorder %s23, 0
      %p43 = por %p41, %p42
      %p44 = scmp.ne.s32.totalorder %s33, %s36
      %p45 = scmp.eq.s32.totalorder %s28, 1
      %p46 = por %p44, %p45
      %p47 = scmp.ne.s32.totalorder %s36, %s37
      %p48 = scmp.eq.s32.totalorder %s28, 0
      %p49 = por %p47, %p48
      %p50 = scmp.ne.s32.totalorder %s36, %s37
      %p51 = scmp.eq.s32.totalorder %s29, 1
      %p52 = por %p50, %p51
      %p54 = scmp.ne.s32.totalorder %s37, %s53
      %p55 = scmp.eq.s32.totalorder %s29, 0
      %p56 = por %p54, %p55
      %s57 = ssub.s32 %s23, %s30
      %p58 = scmp.eq.s32.totalorder %s57, 0
      %s60 = sadd.s32 %s59, 1
      %s61 = scalar_select %p58, %s59, %s60
      %p64 = pneg %p58
      %p65 = scmp.eq.s32.totalorder %s23, 1
      %p66 = por %p64, %p65
      %p67 = scmp.ne.s32.totalorder %s59, %s62
      %p68 = scmp.eq.s32.totalorder %s23, 0
      %p69 = por %p67, %p68
      %p70 = scmp.ne.s32.totalorder %s59, %s62
      %p71 = scmp.eq.s32.totalorder %s28, 1
      %p72 = por %p70, %p71
      %p73 = scmp.ne.s32.totalorder %s62, %s63
      %p74 = scmp.eq.s32.totalorder %s28, 0
      %p75 = por %p73, %p74
      %p76 = scmp.ne.s32.totalorder %s62, %s63
      %p77 = scmp.eq.s32.totalorder %s29, 1
      %p78 = por %p76, %p77
      %p80 = scmp.ne.s32.totalorder %s63, %s79
      %p81 = scmp.eq.s32.totalorder %s29, 0
      %p82 = por %p80, %p81
      %s84 = sadd.s32 %s83, 1
      %p87 = scmp.eq.s32.totalorder %s23, 1
      %p88 = scmp.ne.s32.totalorder %s83, %s85
      %p89 = scmp.eq.s32.totalorder %s23, 0
      %p90 = por %p88, %p89
      %p91 = scmp.ne.s32.totalorder %s83, %s85
      %p92 = scmp.eq.s32.totalorder %s28, 1
      %p93 = por %p91, %p92
      %p94 = scmp.ne.s32.totalorder %s85, %s86
      %p95 = scmp.eq.s32.totalorder %s28, 0
      %p96 = por %p94, %p95
      %p97 = scmp.ne.s32.totalorder %s85, %s86
      %p98 = scmp.eq.s32.totalorder %s29, 1
      %p99 = por %p97, %p98
      %p101 = scmp.ne.s32.totalorder %s86, %s100
      %p102 = scmp.eq.s32.totalorder %s29, 0
      %p103 = por %p101, %p102
      %s105 = sadd.s32 %s104, 1
      %p108 = scmp.eq.s32.totalorder %s23, 1
      %p109 = scmp.ne.s32.totalorder %s104, %s106
      %p110 = scmp.eq.s32.totalorder %s23, 0
      %p111 = por %p109, %p110
      %p112 = scmp.ne.s32.totalorder %s104, %s106
      %p113 = scmp.eq.s32.totalorder %s28, 1
      %p114 = por %p112, %p113
      %p115 = scmp.ne.s32.totalorder %s106, %s107
      %p116 = scmp.eq.s32.totalorder %s28, 0
      %p117 = por %p115, %p116
      %p118 = scmp.ne.s32.totalorder %s106, %s107
      %p119 = scmp.eq.s32.totalorder %s29, 1
      %p120 = por %p118, %p119
      %p122 = scmp.ne.s32.totalorder %s107, %s121
      %p123 = scmp.eq.s32.totalorder %s29, 0
      %p124 = por %p122, %p123
      %s126 = sadd.s32 %s125, 1
      %p129 = scmp.eq.s32.totalorder %s23, 1
      %p130 = scmp.ne.s32.totalorder %s125, %s127
      %p131 = scmp.eq.s32.totalorder %s23, 0
      %p132 = por %p130, %p131
      %p133 = scmp.ne.s32.totalorder %s125, %s127
      %p134 = scmp.eq.s32.totalorder %s28, 1
      %p135 = por %p133, %p134
      %p136 = scmp.ne.s32.totalorder %s127, %s128
      %p137 = scmp.eq.s32.totalorder %s28, 0
      %p138 = por %p136, %p137
      %p139 = scmp.ne.s32.totalorder %s127, %s128
      %p140 = scmp.eq.s32.totalorder %s29, 1
      %p141 = por %p139, %p140
      %p143 = scmp.ne.s32.totalorder %s128, %s142
      %p144 = scmp.eq.s32.totalorder %s29, 0
      %p145 = por %p143, %p144
      %s147 = sadd.s32 %s146, 1
      %p150 = scmp.eq.s32.totalorder %s23, 1
      %p151 = scmp.ne.s32.totalorder %s146, %s148
      %p152 = scmp.eq.s32.totalorder %s23, 0
      %p153 = por %p151, %p152
      %p154 = scmp.ne.s32.totalorder %s146, %s148
      %p155 = scmp.eq.s32.totalorder %s28, 1
      %p156 = por %p154, %p155
      %p157 = scmp.ne.s32.totalorder %s148, %s149
      %p158 = scmp.eq.s32.totalorder %s28, 0
      %p159 = por %p157, %p158
      %p160 = scmp.ne.s32.totalorder %s148, %s149
      %p161 = scmp.eq.s32.totalorder %s29, 1
      %p162 = por %p160, %p161
      %p164 = scmp.ne.s32.totalorder %s149, %s163
      %p165 = scmp.eq.s32.totalorder %s29, 0
      %p166 = por %p164, %p165
      %s168 = sadd.s32 %s167, 1
      %p171 = scmp.eq.s32.totalorder %s23, 1
      %p172 = scmp.ne.s32.totalorder %s167, %s169
      %p173 = scmp.eq.s32.totalorder %s23, 0
      %p174 = por %p172, %p173
      %p175 = scmp.ne.s32.totalorder %s167, %s169
      %p176 = scmp.eq.s32.totalorder %s28, 1
      %p177 = por %p175, %p176
      %p178 = scmp.ne.s32.totalorder %s169, %s170
      %p179 = scmp.eq.s32.totalorder %s28, 0
      %p180 = por %p178, %p179
      %p181 = scmp.ne.s32.totalorder %s169, %s170
      %p182 = scmp.eq.s32.totalorder %s29, 1
      %p183 = por %p181, %p182
      %p185 = scmp.ne.s32.totalorder %s170, %s184
      %p186 = scmp.eq.s32.totalorder %s29, 0
      %p187 = por %p185, %p186
      %s188 = ssub.s32 %s23, %s30
      %p189 = scmp.eq.s32.totalorder %s188, 0
      %s191 = sadd.s32 %s190, 1
      %s192 = scalar_select %p189, %s190, %s191
      %p195 = pneg %p189
      %p196 = scmp.eq.s32.totalorder %s23, 1
      %p197 = por %p195, %p196
      %p198 = scmp.ne.s32.totalorder %s190, %s193
      %p199 = scmp.eq.s32.totalorder %s23, 0
      %p200 = por %p198, %p199
      %p201 = scmp.ne.s32.totalorder %s190, %s193
      %p202 = scmp.eq.s32.totalorder %s28, 1
      %p203 = por %p201, %p202
      %p204 = scmp.ne.s32.totalorder %s193, %s194
      %p205 = scmp.eq.s32.totalorder %s28, 0
      %p206 = por %p204, %p205
      %p207 = scmp.ne.s32.totalorder %s193, %s194
      %p208 = scmp.eq.s32.totalorder %s29, 1
      %p209 = por %p207, %p208
      %p211 = scmp.ne.s32.totalorder %s194, %s210
      %p212 = scmp.eq.s32.totalorder %s29, 0
      %p213 = por %p211, %p212
      %p214 = scmp.le.s32.totalorder 1, %s23
      %p215 = scmp.lt.s32.totalorder %s23, 3
      %p216 = pnand %p214, %p215
      %p217 = pneg %p216
      // Predicated region
      $region9: #{tpu_custom_call.1} parent=5 // pred_check
        _
      $region10: #{tpu_custom_call.1} parent=5 // pred_check_branch
        %219 = sbr.rel (%p216) target = $region12
      $region11: #{tpu_custom_call.1} parent=5 // pred_region
        %s220 = ssub.s32 %s23, 1
        // Predicated region
        $region13: #{tpu_custom_call.1} parent=11 // pred_check
          %p221 = pneg %p96
        $region14: #{tpu_custom_call.1} parent=11 // pred_check_branch
          %223 = sbr.rel (%p221) target = $region16
        $region15: #{tpu_custom_call.1} parent=11 // pred_region
          %s225 = ssub.s32 2048, 2048
          %226 = vsyncadd [#allocation6], %s225
          %s227 = sshll.u32 [#allocation7], 4
          %s228 = int_to_ptr.vmem [resolvable:$true] %s227
          %233 = dma.hbm_to_vmem [thread:$0]  %s2, 2048, %s228, [#allocation6], 128, 128, 8
        $region16: #{tpu_custom_call.1} parent=11 // pred_fallthru
          _
        // Predicated region
        $region17: #{tpu_custom_call.1} parent=11 // pred_check
          %p234 = pneg %p117
        $region18: #{tpu_custom_call.1} parent=11 // pred_check_branch
          %236 = sbr.rel (%p234) target = $region20
        $region19: #{tpu_custom_call.1} parent=11 // pred_region
          %s238 = ssub.s32 2048, 2048
          %239 = vsyncadd [#allocation9], %s238
          %s240 = sshll.u32 [#allocation8], 4
          %s241 = int_to_ptr.vmem [resolvable:$true] %s240
          %246 = dma.hbm_to_vmem [thread:$0]  %s3, 2048, %s241, [#allocation9], 128, 128, 8
        $region20: #{tpu_custom_call.1} parent=11 // pred_fallthru
          _
        // Predicated region
        $region21: #{tpu_custom_call.1} parent=11 // pred_check
          %p247 = pneg %p138
        $region22: #{tpu_custom_call.1} parent=11 // pred_check_branch
          %249 = sbr.rel (%p247) target = $region24
        $region23: #{tpu_custom_call.1} parent=11 // pred_region
          _
        $region24: #{tpu_custom_call.1} parent=11 // pred_fallthru
          _
        // Predicated region
        $region25: #{tpu_custom_call.1} parent=11 // pred_check
          %p250 = pneg %p159
        $region26: #{tpu_custom_call.1} parent=11 // pred_check_branch
          %252 = sbr.rel (%p250) target = $region28
        $region27: #{tpu_custom_call.1} parent=11 // pred_region
          _
        $region28: #{tpu_custom_call.1} parent=11 // pred_fallthru
          _
        // Predicated region
        $region29: #{tpu_custom_call.1} parent=11 // pred_check
          %p253 = pneg %p180
        $region30: #{tpu_custom_call.1} parent=11 // pred_check_branch
          %255 = sbr.rel (%p253) target = $region32
        $region31: #{tpu_custom_call.1} parent=11 // pred_region
          _
        $region32: #{tpu_custom_call.1} parent=11 // pred_fallthru
          _
      $region12: #{tpu_custom_call.1} parent=5 // pred_fallthru
        _
      %p256 = scmp.lt.s32.totalorder %s23, 2
      // Predicated region
      $region33: #{tpu_custom_call.1} parent=5 // pred_check
        %p257 = pneg %p256
      $region34: #{tpu_custom_call.1} parent=5 // pred_check_branch
        %259 = sbr.rel (%p257) target = $region36
      $region35: #{tpu_custom_call.1} parent=5 // pred_region
        // Predicated region
        $region37: #{tpu_custom_call.1} parent=35 // pred_check
          %p260 = pneg %p43
        $region38: #{tpu_custom_call.1} parent=35 // pred_check_branch
          %262 = sbr.rel (%p260) target = $region40
        $region39: #{tpu_custom_call.1} parent=35 // pred_region
          %s263 = sand.u32 %s33, 1
          %s264 = scalar_lea.sflag [#allocation3], %s263
          %s265 = sand.u32 %s33, 1
          %s266 = smul.addr %s265, 128
          %s267 = scalar_lea.vmem [#allocation2], %s266
          %s269 = ssub.s32 2048, 2048
          %270 = vsyncadd %s264, %s269
          %s271 = smul.addr %s23, 16
          %s272 = smul.addr %s271, 128
          %s273 = scalar_lea.hbm %s0, %s272
          %s274 = sshll.u32 %s267, 4
          %s275 = int_to_ptr.vmem [resolvable:$true] %s274
          %280 = dma.hbm_to_vmem [thread:$0]  %s273, 2048, %s275, %s264, 128, 128, 8
        $region40: #{tpu_custom_call.1} parent=35 // pred_fallthru
          _
        // Predicated region
        $region41: #{tpu_custom_call.1} parent=35 // pred_check
          %p281 = pneg %p69
        $region42: #{tpu_custom_call.1} parent=35 // pred_check_branch
          %283 = sbr.rel (%p281) target = $region44
        $region43: #{tpu_custom_call.1} parent=35 // pred_region
          %s284 = sand.u32 %s23, 1
          %s285 = scalar_lea.sflag [#allocation6], %s284
          %s286 = sand.u32 %s59, 1
          %s287 = smul.addr %s286, 128
          %s288 = scalar_lea.vmem [#allocation5], %s287
          %s290 = ssub.s32 2048, 2048
          %291 = vsyncadd %s285, %s290
          %s292 = smul.addr %s23, 16
          %s293 = smul.addr %s292, 128
          %s294 = scalar_lea.hbm %s1, %s293
          %s295 = sshll.u32 %s288, 4
          %s296 = int_to_ptr.vmem [resolvable:$true] %s295
          %301 = dma.hbm_to_vmem [thread:$0]  %s294, 2048, %s296, %s285, 128, 128, 8
        $region44: #{tpu_custom_call.1} parent=35 // pred_fallthru
          _
      $region36: #{tpu_custom_call.1} parent=5 // pred_fallthru
        _
      %p302 = scmp.le.s32.totalorder 1, %s23
      %p303 = scmp.lt.s32.totalorder %s23, 3
      %p304 = pnand %p302, %p303
      %p305 = pneg %p304
      // Predicated region
      $region45: #{tpu_custom_call.1} parent=5 // pred_check
        _
      $region46: #{tpu_custom_call.1} parent=5 // pred_check_branch
        %307 = sbr.rel (%p304) target = $region48
      $region47: #{tpu_custom_call.1} parent=5 // pred_region
        %s308 = ssub.s32 %s23, 1
        %s309 = sand.u32 %s36, 1
        %s310 = scalar_lea.sflag [#allocation3], %s309
        %s311 = sand.u32 %s36, 1
        %s312 = smul.addr %s311, 128
        %s313 = scalar_lea.vmem [#allocation2], %s312
        // Predicated region
        $region49: #{tpu_custom_call.1} parent=47 // pred_check
          %p314 = pneg %p49
        $region50: #{tpu_custom_call.1} parent=47 // pred_check_branch
          %316 = sbr.rel (%p314) target = $region52
        $region51: #{tpu_custom_call.1} parent=47 // pred_region
          %317 = dma.done %s310, 2048
        $region52: #{tpu_custom_call.1} parent=47 // pred_fallthru
          _
        %s318 = sand.u32 %s28, 1
        %s319 = scalar_lea.sflag [#allocation6], %s318
        %s320 = sand.u32 %s62, 1
        %s321 = smul.addr %s320, 128
        %s322 = scalar_lea.vmem [#allocation5], %s321
        // Predicated region
        $region53: #{tpu_custom_call.1} parent=47 // pred_check
          %p323 = pneg %p75
        $region54: #{tpu_custom_call.1} parent=47 // pred_check_branch
          %325 = sbr.rel (%p323) target = $region56
        $region55: #{tpu_custom_call.1} parent=47 // pred_region
          %326 = dma.done %s319, 2048
        $region56: #{tpu_custom_call.1} parent=47 // pred_fallthru
          _
        // Predicated region
        $region57: #{tpu_custom_call.1} parent=47 // pred_check
          %p327 = pneg %p96
        $region58: #{tpu_custom_call.1} parent=47 // pred_check_branch
          %329 = sbr.rel (%p327) target = $region60
        $region59: #{tpu_custom_call.1} parent=47 // pred_region
          %330 = dma.done [#allocation6], 2048
        $region60: #{tpu_custom_call.1} parent=47 // pred_fallthru
          _
        // Predicated region
        $region61: #{tpu_custom_call.1} parent=47 // pred_check
          %p331 = pneg %p117
        $region62: #{tpu_custom_call.1} parent=47 // pred_check_branch
          %333 = sbr.rel (%p331) target = $region64
        $region63: #{tpu_custom_call.1} parent=47 // pred_region
          %334 = dma.done [#allocation9], 2048
        $region64: #{tpu_custom_call.1} parent=47 // pred_fallthru
          _
        %s335 = sand.u32 %s36, 1
        %s336 = scalar_lea.sflag [#allocation3], %s335
        %s337 = sand.u32 %s36, 1
        %s338 = smul.addr %s337, 128
        %s339 = scalar_lea.vmem [#allocation2], %s338
        %p340 = pneg %p49
        %p341 = pneg %p46
        %s342 = sand.u32 %s28, 1
        %s343 = scalar_lea.sflag [#allocation6], %s342
        %s344 = sand.u32 %s62, 1
        %s345 = smul.addr %s344, 128
        %s346 = scalar_lea.vmem [#allocation5], %s345
        %p347 = pneg %p75
        %p348 = pneg %p72
        %p349 = pneg %p96
        %p350 = pneg %p93
        %p351 = pneg %p117
        %p352 = pneg %p114
        %p353 = pneg %p138
        %p354 = pneg %p135
        %p355 = pneg %p159
        %p356 = pneg %p156
        %p357 = pneg %p180
        %p358 = pneg %p177
        %p359 = pneg %p206
        %p360 = pneg %p203
        %s361 = sand.u32 %s193, 1
        %s362 = scalar_lea.sflag [#allocation4], %s361
        %s363 = sand.u32 %s193, 1
        %s364 = smul.addr %s363, 128
        %s365 = scalar_lea.vmem [#allocation10], %s364
        %v366 = vld [vmem:[%s313] sm:$0xff]
        %v367 = vld [vmem:[%s313 + $0x8] sm:$0xff]
        %v368 = vld [vmem:[%s313 + $0x10] sm:$0xff]
        %v369 = vld [vmem:[%s313 + $0x18] sm:$0xff]
        %v370 = vld [vmem:[%s313 + $0x20] sm:$0xff]
        %v371 = vld [vmem:[%s313 + $0x28] sm:$0xff]
        %v372 = vld [vmem:[%s313 + $0x30] sm:$0xff]
        %v373 = vld [vmem:[%s313 + $0x38] sm:$0xff]
        %v374 = vld [vmem:[%s313 + $0x40] sm:$0xff]
        %v375 = vld [vmem:[%s313 + $0x48] sm:$0xff]
        %v376 = vld [vmem:[%s313 + $0x50] sm:$0xff]
        %v377 = vld [vmem:[%s313 + $0x58] sm:$0xff]
        %v378 = vld [vmem:[%s313 + $0x60] sm:$0xff]
        %v379 = vld [vmem:[%s313 + $0x68] sm:$0xff]
        %v380 = vld [vmem:[%s313 + $0x70] sm:$0xff]
        %v381 = vld [vmem:[%s313 + $0x78] sm:$0xff]
        %v382 = vld [vmem:[%s322] sm:$0xff]
        %v383 = vld [vmem:[%s322 + $0x8] sm:$0xff]
        %v384 = vld [vmem:[%s322 + $0x10] sm:$0xff]
        %v385 = vld [vmem:[%s322 + $0x18] sm:$0xff]
        %v386 = vld [vmem:[%s322 + $0x20] sm:$0xff]
        %v387 = vld [vmem:[%s322 + $0x28] sm:$0xff]
        %v388 = vld [vmem:[%s322 + $0x30] sm:$0xff]
        %v389 = vld [vmem:[%s322 + $0x38] sm:$0xff]
        %v390 = vld [vmem:[%s322 + $0x40] sm:$0xff]
        %v391 = vld [vmem:[%s322 + $0x48] sm:$0xff]
        %v392 = vld [vmem:[%s322 + $0x50] sm:$0xff]
        %v393 = vld [vmem:[%s322 + $0x58] sm:$0xff]
        %v394 = vld [vmem:[%s322 + $0x60] sm:$0xff]
        %v395 = vld [vmem:[%s322 + $0x68] sm:$0xff]
        %v396 = vld [vmem:[%s322 + $0x70] sm:$0xff]
        %v397 = vld [vmem:[%s322 + $0x78] sm:$0xff]
        %398 = vmatprep.subr.mxu0 0.0
        %399 = vmatpush1.msra.mxu0 %v397
        %400 = vmatprep.subr.mxu0 0.0
        %401 = vmatpush1.msra.mxu0 %v396
        %402 = vmatprep.subr.mxu0 0.0
        %403 = vmatpush1.msra.mxu0 %v395
        %404 = vmatprep.subr.mxu0 0.0
        %405 = vmatpush1.msra.mxu0 %v394
        %406 = vmatprep.subr.mxu0 0.0
        %407 = vmatpush1.msra.mxu0 %v393
        %408 = vmatprep.subr.mxu0 0.0
        %409 = vmatpush1.msra.mxu0 %v392
        %410 = vmatprep.subr.mxu0 0.0
        %411 = vmatpush1.msra.mxu0 %v391
        %412 = vmatprep.subr.mxu0 0.0
        %413 = vmatpush1.msra.mxu0 %v390
        %414 = vmatprep.subr.mxu0 0.0
        %415 = vmatpush1.msra.mxu0 %v389
        %416 = vmatprep.subr.mxu0 0.0
        %417 = vmatpush1.msra.mxu0 %v388
        %418 = vmatprep.subr.mxu0 0.0
        %419 = vmatpush1.msra.mxu0 %v387
        %420 = vmatprep.subr.mxu0 0.0
        %421 = vmatpush1.msra.mxu0 %v386
        %422 = vmatprep.subr.mxu0 0.0
        %423 = vmatpush1.msra.mxu0 %v385
        %424 = vmatprep.subr.mxu0 0.0
        %425 = vmatpush1.msra.mxu0 %v384
        %426 = vmatprep.subr.mxu0 0.0
        %427 = vmatpush1.msra.mxu0 %v383
        %428 = vmatprep.subr.mxu0 0.0
        %429 = vmatpush1.msra.mxu0 %v382
        %430 = vmatprep.subr.mxu0 0.0
        %431 = vmatpush2.msra.mxu0 0.0
        %432 = vmatprep.subr.mxu0 0.0
        %433 = vmatpush2.msra.mxu0 0.0
        %434 = vmatprep.subr.mxu0 0.0
        %435 = vmatpush2.msra.mxu0 0.0
        %436 = vmatprep.subr.mxu0 0.0
        %437 = vmatpush2.msra.mxu0 0.0
        %438 = vmatprep.subr.mxu0 0.0
        %439 = vmatpush2.msra.mxu0 0.0
        %440 = vmatprep.subr.mxu0 0.0
        %441 = vmatpush2.msra.mxu0 0.0
        %442 = vmatprep.subr.mxu0 0.0
        %443 = vmatpush2.msra.mxu0 0.0
        %444 = vmatprep.subr.mxu0 0.0
        %445 = vmatpush2.msra.mxu0 0.0
        %446 = vmatprep.subr.mxu0 0.0
        %447 = vmatpush2.msra.mxu0 0.0
        %448 = vmatprep.subr.mxu0 0.0
        %449 = vmatpush2.msra.mxu0 0.0
        %450 = vmatprep.subr.mxu0 0.0
        %451 = vmatpush2.msra.mxu0 0.0
        %452 = vmatprep.subr.mxu0 0.0
        %453 = vmatpush2.msra.mxu0 0.0
        %454 = vmatprep.subr.mxu0 0.0
        %455 = vmatpush2.msra.mxu0 0.0
        %456 = vmatprep.subr.mxu0 0.0
        %457 = vmatpush2.msra.mxu0 0.0
        %458 = vmatprep.subr.mxu0 0.0
        %459 = vmatpush2.msra.mxu0 0.0
        %460 = vmatprep.subr.mxu0 0.0
        %461 = vmatpush2.msra.mxu0 0.0
        %462 = vmatprep.mubr.f32.mxu0 0.0
        %463 = vmatmul.mubr.f32.gmra.mxu0 %v366
        %v464 = vpop.f32.mrf.mxu0
        %v465 = vadd.f32 0.0, %v464
        %v466 = vpop.f32.mrf.mxu0
        %467 = vmatprep.mubr.f32.mxu0 0.0
        %468 = vmatmul.mubr.f32.gmra.mxu0 %v367
        %v469 = vpop.f32.mrf.mxu0
        %v470 = vadd.f32 0.0, %v469
        %v471 = vpop.f32.mrf.mxu0
        %472 = vmatprep.mubr.f32.mxu0 0.0
        %473 = vmatmul.mubr.f32.gmra.mxu0 %v368
        %v474 = vpop.f32.mrf.mxu0
        %v475 = vadd.f32 0.0, %v474
        %v476 = vpop.f32.mrf.mxu0
        %477 = vmatprep.mubr.f32.mxu0 0.0
        %478 = vmatmul.mubr.f32.gmra.mxu0 %v369
        %v479 = vpop.f32.mrf.mxu0
        %v480 = vadd.f32 0.0, %v479
        %v481 = vpop.f32.mrf.mxu0
        %482 = vmatprep.mubr.f32.mxu0 0.0
        %483 = vmatmul.mubr.f32.gmra.mxu0 %v370
        %v484 = vpop.f32.mrf.mxu0
        %v485 = vadd.f32 0.0, %v484
        %v486 = vpop.f32.mrf.mxu0
        %487 = vmatprep.mubr.f32.mxu0 0.0
        %488 = vmatmul.mubr.f32.gmra.mxu0 %v371
        %v489 = vpop.f32.mrf.mxu0
        %v490 = vadd.f32 0.0, %v489
        %v491 = vpop.f32.mrf.mxu0
        %492 = vmatprep.mubr.f32.mxu0 0.0
        %493 = vmatmul.mubr.f32.gmra.mxu0 %v372
        %v494 = vpop.f32.mrf.mxu0
        %v495 = vadd.f32 0.0, %v494
        %v496 = vpop.f32.mrf.mxu0
        %497 = vmatprep.mubr.f32.mxu0 0.0
        %498 = vmatmul.mubr.f32.gmra.mxu0 %v373
        %v499 = vpop.f32.mrf.mxu0
        %v500 = vadd.f32 0.0, %v499
        %v501 = vpop.f32.mrf.mxu0
        %502 = vmatprep.mubr.f32.mxu0 0.0
        %503 = vmatmul.mubr.f32.gmra.mxu0 %v374
        %v504 = vpop.f32.mrf.mxu0
        %v505 = vadd.f32 0.0, %v504
        %v506 = vpop.f32.mrf.mxu0
        %507 = vmatprep.mubr.f32.mxu0 0.0
        %508 = vmatmul.mubr.f32.gmra.mxu0 %v375
        %v509 = vpop.f32.mrf.mxu0
        %v510 = vadd.f32 0.0, %v509
        %v511 = vpop.f32.mrf.mxu0
        %512 = vmatprep.mubr.f32.mxu0 0.0
        %513 = vmatmul.mubr.f32.gmra.mxu0 %v376
        %v514 = vpop.f32.mrf.mxu0
        %v515 = vadd.f32 0.0, %v514
        %v516 = vpop.f32.mrf.mxu0
        %517 = vmatprep.mubr.f32.mxu0 0.0
        %518 = vmatmul.mubr.f32.gmra.mxu0 %v377
        %v519 = vpop.f32.mrf.mxu0
        %v520 = vadd.f32 0.0, %v519
        %v521 = vpop.f32.mrf.mxu0
        %522 = vmatprep.mubr.f32.mxu0 0.0
        %523 = vmatmul.mubr.f32.gmra.mxu0 %v378
        %v524 = vpop.f32.mrf.mxu0
        %v525 = vadd.f32 0.0, %v524
        %v526 = vpop.f32.mrf.mxu0
        %527 = vmatprep.mubr.f32.mxu0 0.0
        %528 = vmatmul.mubr.f32.gmra.mxu0 %v379
        %v529 = vpop.f32.mrf.mxu0
        %v530 = vadd.f32 0.0, %v529
        %v531 = vpop.f32.mrf.mxu0
        %532 = vmatprep.mubr.f32.mxu0 0.0
        %533 = vmatmul.mubr.f32.gmra.mxu0 %v380
        %v534 = vpop.f32.mrf.mxu0
        %v535 = vadd.f32 0.0, %v534
        %v536 = vpop.f32.mrf.mxu0
        %537 = vmatprep.mubr.f32.mxu0 0.0
        %538 = vmatmul.mubr.f32.gmra.mxu0 %v381
        %v539 = vpop.f32.mrf.mxu0
        %v540 = vadd.f32 0.0, %v539
        %v541 = vpop.f32.mrf.mxu0
        %542 = vdwg.mxu0
        %543 = vmatprep.subr.mxu0 0.0
        %544 = vmatpush1.msra.mxu0 %v540
        %545 = vmatprep.subr.mxu0 0.0
        %546 = vmatpush1.msra.mxu0 %v535
        %547 = vmatprep.subr.mxu0 0.0
        %548 = vmatpush1.msra.mxu0 %v530
        %549 = vmatprep.subr.mxu0 0.0
        %550 = vmatpush1.msra.mxu0 %v525
        %551 = vmatprep.subr.mxu0 0.0
        %552 = vmatpush1.msra.mxu0 %v520
        %553 = vmatprep.subr.mxu0 0.0
        %554 = vmatpush1.msra.mxu0 %v515
        %555 = vmatprep.subr.mxu0 0.0
        %556 = vmatpush1.msra.mxu0 %v510
        %557 = vmatprep.subr.mxu0 0.0
        %558 = vmatpush1.msra.mxu0 %v505
        %559 = vmatprep.subr.mxu0 0.0
        %560 = vmatpush1.msra.mxu0 %v500
        %561 = vmatprep.subr.mxu0 0.0
        %562 = vmatpush1.msra.mxu0 %v495
        %563 = vmatprep.subr.mxu0 0.0
        %564 = vmatpush1.msra.mxu0 %v490
        %565 = vmatprep.subr.mxu0 0.0
        %566 = vmatpush1.msra.mxu0 %v485
        %567 = vmatprep.subr.mxu0 0.0
        %568 = vmatpush1.msra.mxu0 %v480
        %569 = vmatprep.subr.mxu0 0.0
        %570 = vmatpush1.msra.mxu0 %v475
        %571 = vmatprep.subr.mxu0 0.0
        %572 = vmatpush1.msra.mxu0 %v470
        %573 = vmatprep.subr.mxu0 0.0
        %574 = vmatpush1.msra.mxu0 %v465
        %575 = vmatprep.subr.mxu0 0.0
        %576 = vmatpush2.msra.mxu0 0.0
        %577 = vmatprep.subr.mxu0 0.0
        %578 = vmatpush2.msra.mxu0 0.0
        %579 = vmatprep.subr.mxu0 0.0
        %580 = vmatpush2.msra.mxu0 0.0
        %581 = vmatprep.subr.mxu0 0.0
        %582 = vmatpush2.msra.mxu0 0.0
        %583 = vmatprep.subr.mxu0 0.0
        %584 = vmatpush2.msra.mxu0 0.0
        %585 = vmatprep.subr.mxu0 0.0
        %586 = vmatpush2.msra.mxu0 0.0
        %587 = vmatprep.subr.mxu0 0.0
        %588 = vmatpush2.msra.mxu0 0.0
        %589 = vmatprep.subr.mxu0 0.0
        %590 = vmatpush2.msra.mxu0 0.0
        %591 = vmatprep.subr.mxu0 0.0
        %592 = vmatpush2.msra.mxu0 0.0
        %593 = vmatprep.subr.mxu0 0.0
        %594 = vmatpush2.msra.mxu0 0.0
        %595 = vmatprep.subr.mxu0 0.0
        %596 = vmatpush2.msra.mxu0 0.0
        %597 = vmatprep.subr.mxu0 0.0
        %598 = vmatpush2.msra.mxu0 0.0
        %599 = vmatprep.subr.mxu0 0.0
        %600 = vmatpush2.msra.mxu0 0.0
        %601 = vmatprep.subr.mxu0 0.0
        %602 = vmatpush2.msra.mxu0 0.0
        %603 = vmatprep.subr.mxu0 0.0
        %604 = vmatpush2.msra.mxu0 0.0
        %605 = vmatprep.subr.mxu0 0.0
        %606 = vmatpush2.msra.mxu0 0.0
        %607 = vmatprep.mubr.f32.mxu0 0.0
        %608 = vmatmul.mubr.f32.gmra.mxu0 %v366
        %v609 = vpop.f32.mrf.mxu0
        %v610 = vadd.f32 0.0, %v609
        %v611 = vpop.f32.mrf.mxu0
        %612 = vmatprep.mubr.f32.mxu0 0.0
        %613 = vmatmul.mubr.f32.gmra.mxu0 %v367
        %v614 = vpop.f32.mrf.mxu0
        %v615 = vadd.f32 0.0, %v614
        %v616 = vpop.f32.mrf.mxu0
        %617 = vmatprep.mubr.f32.mxu0 0.0
        %618 = vmatmul.mubr.f32.gmra.mxu0 %v368
        %v619 = vpop.f32.mrf.mxu0
        %v620 = vadd.f32 0.0, %v619
        %v621 = vpop.f32.mrf.mxu0
        %622 = vmatprep.mubr.f32.mxu0 0.0
        %623 = vmatmul.mubr.f32.gmra.mxu0 %v369
        %v624 = vpop.f32.mrf.mxu0
        %v625 = vadd.f32 0.0, %v624
        %v626 = vpop.f32.mrf.mxu0
        %627 = vmatprep.mubr.f32.mxu0 0.0
        %628 = vmatmul.mubr.f32.gmra.mxu0 %v370
        %v629 = vpop.f32.mrf.mxu0
        %v630 = vadd.f32 0.0, %v629
        %v631 = vpop.f32.mrf.mxu0
        %632 = vmatprep.mubr.f32.mxu0 0.0
        %633 = vmatmul.mubr.f32.gmra.mxu0 %v371
        %v634 = vpop.f32.mrf.mxu0
        %v635 = vadd.f32 0.0, %v634
        %v636 = vpop.f32.mrf.mxu0
        %637 = vmatprep.mubr.f32.mxu0 0.0
        %638 = vmatmul.mubr.f32.gmra.mxu0 %v372
        %v639 = vpop.f32.mrf.mxu0
        %v640 = vadd.f32 0.0, %v639
        %v641 = vpop.f32.mrf.mxu0
        %642 = vmatprep.mubr.f32.mxu0 0.0
        %643 = vmatmul.mubr.f32.gmra.mxu0 %v373
        %v644 = vpop.f32.mrf.mxu0
        %v645 = vadd.f32 0.0, %v644
        %v646 = vpop.f32.mrf.mxu0
        %647 = vmatprep.mubr.f32.mxu0 0.0
        %648 = vmatmul.mubr.f32.gmra.mxu0 %v374
        %v649 = vpop.f32.mrf.mxu0
        %v650 = vadd.f32 0.0, %v649
        %v651 = vpop.f32.mrf.mxu0
        %652 = vmatprep.mubr.f32.mxu0 0.0
        %653 = vmatmul.mubr.f32.gmra.mxu0 %v375
        %v654 = vpop.f32.mrf.mxu0
        %v655 = vadd.f32 0.0, %v654
        %v656 = vpop.f32.mrf.mxu0
        %657 = vmatprep.mubr.f32.mxu0 0.0
        %658 = vmatmul.mubr.f32.gmra.mxu0 %v376
        %v659 = vpop.f32.mrf.mxu0
        %v660 = vadd.f32 0.0, %v659
        %v661 = vpop.f32.mrf.mxu0
        %662 = vmatprep.mubr.f32.mxu0 0.0
        %663 = vmatmul.mubr.f32.gmra.mxu0 %v377
        %v664 = vpop.f32.mrf.mxu0
        %v665 = vadd.f32 0.0, %v664
        %v666 = vpop.f32.mrf.mxu0
        %667 = vmatprep.mubr.f32.mxu0 0.0
        %668 = vmatmul.mubr.f32.gmra.mxu0 %v378
        %v669 = vpop.f32.mrf.mxu0
        %v670 = vadd.f32 0.0, %v669
        %v671 = vpop.f32.mrf.mxu0
        %672 = vmatprep.mubr.f32.mxu0 0.0
        %673 = vmatmul.mubr.f32.gmra.mxu0 %v379
        %v674 = vpop.f32.mrf.mxu0
        %v675 = vadd.f32 0.0, %v674
        %v676 = vpop.f32.mrf.mxu0
        %677 = vmatprep.mubr.f32.mxu0 0.0
        %678 = vmatmul.mubr.f32.gmra.mxu0 %v380
        %v679 = vpop.f32.mrf.mxu0
        %v680 = vadd.f32 0.0, %v679
        %v681 = vpop.f32.mrf.mxu0
        %682 = vmatprep.mubr.f32.mxu0 0.0
        %683 = vmatmul.mubr.f32.gmra.mxu0 %v381
        %v684 = vpop.f32.mrf.mxu0
        %v685 = vadd.f32 0.0, %v684
        %v686 = vpop.f32.mrf.mxu0
        %687 = vdwg.mxu0
        %v688 = vld [vmem:[#allocation7] sm:$0xff]
        %v689 = vld [vmem:[#allocation7 + $0x8] sm:$0xff]
        %v690 = vld [vmem:[#allocation7 + $0x10] sm:$0xff]
        %v691 = vld [vmem:[#allocation7 + $0x18] sm:$0xff]
        %v692 = vld [vmem:[#allocation7 + $0x20] sm:$0xff]
        %v693 = vld [vmem:[#allocation7 + $0x28] sm:$0xff]
        %v694 = vld [vmem:[#allocation7 + $0x30] sm:$0xff]
        %v695 = vld [vmem:[#allocation7 + $0x38] sm:$0xff]
        %v696 = vld [vmem:[#allocation7 + $0x40] sm:$0xff]
        %v697 = vld [vmem:[#allocation7 + $0x48] sm:$0xff]
        %v698 = vld [vmem:[#allocation7 + $0x50] sm:$0xff]
        %v699 = vld [vmem:[#allocation7 + $0x58] sm:$0xff]
        %v700 = vld [vmem:[#allocation7 + $0x60] sm:$0xff]
        %v701 = vld [vmem:[#allocation7 + $0x68] sm:$0xff]
        %v702 = vld [vmem:[#allocation7 + $0x70] sm:$0xff]
        %v703 = vld [vmem:[#allocation7 + $0x78] sm:$0xff]
        %704 = vmatprep.subr.mxu0 0.0
        %705 = vmatpush1.msra.mxu0 %v703
        %706 = vmatprep.subr.mxu0 0.0
        %707 = vmatpush1.msra.mxu0 %v702
        %708 = vmatprep.subr.mxu0 0.0
        %709 = vmatpush1.msra.mxu0 %v701
        %710 = vmatprep.subr.mxu0 0.0
        %711 = vmatpush1.msra.mxu0 %v700
        %712 = vmatprep.subr.mxu0 0.0
        %713 = vmatpush1.msra.mxu0 %v699
        %714 = vmatprep.subr.mxu0 0.0
        %715 = vmatpush1.msra.mxu0 %v698
        %716 = vmatprep.subr.mxu0 0.0
        %717 = vmatpush1.msra.mxu0 %v697
        %718 = vmatprep.subr.mxu0 0.0
        %719 = vmatpush1.msra.mxu0 %v696
        %720 = vmatprep.subr.mxu0 0.0
        %721 = vmatpush1.msra.mxu0 %v695
        %722 = vmatprep.subr.mxu0 0.0
        %723 = vmatpush1.msra.mxu0 %v694
        %724 = vmatprep.subr.mxu0 0.0
        %725 = vmatpush1.msra.mxu0 %v693
        %726 = vmatprep.subr.mxu0 0.0
        %727 = vmatpush1.msra.mxu0 %v692
        %728 = vmatprep.subr.mxu0 0.0
        %729 = vmatpush1.msra.mxu0 %v691
        %730 = vmatprep.subr.mxu0 0.0
        %731 = vmatpush1.msra.mxu0 %v690
        %732 = vmatprep.subr.mxu0 0.0
        %733 = vmatpush1.msra.mxu0 %v689
        %734 = vmatprep.subr.mxu0 0.0
        %735 = vmatpush1.msra.mxu0 %v688
        %736 = vmatprep.subr.mxu0 0.0
        %737 = vmatpush2.msra.mxu0 0.0
        %738 = vmatprep.subr.mxu0 0.0
        %739 = vmatpush2.msra.mxu0 0.0
        %740 = vmatprep.subr.mxu0 0.0
        %741 = vmatpush2.msra.mxu0 0.0
        %742 = vmatprep.subr.mxu0 0.0
        %743 = vmatpush2.msra.mxu0 0.0
        %744 = vmatprep.subr.mxu0 0.0
        %745 = vmatpush2.msra.mxu0 0.0
        %746 = vmatprep.subr.mxu0 0.0
        %747 = vmatpush2.msra.mxu0 0.0
        %748 = vmatprep.subr.mxu0 0.0
        %749 = vmatpush2.msra.mxu0 0.0
        %750 = vmatprep.subr.mxu0 0.0
        %751 = vmatpush2.msra.mxu0 0.0
        %752 = vmatprep.subr.mxu0 0.0
        %753 = vmatpush2.msra.mxu0 0.0
        %754 = vmatprep.subr.mxu0 0.0
        %755 = vmatpush2.msra.mxu0 0.0
        %756 = vmatprep.subr.mxu0 0.0
        %757 = vmatpush2.msra.mxu0 0.0
        %758 = vmatprep.subr.mxu0 0.0
        %759 = vmatpush2.msra.mxu0 0.0
        %760 = vmatprep.subr.mxu0 0.0
        %761 = vmatpush2.msra.mxu0 0.0
        %762 = vmatprep.subr.mxu0 0.0
        %763 = vmatpush2.msra.mxu0 0.0
        %764 = vmatprep.subr.mxu0 0.0
        %765 = vmatpush2.msra.mxu0 0.0
        %766 = vmatprep.subr.mxu0 0.0
        %767 = vmatpush2.msra.mxu0 0.0
        %768 = vmatprep.mubr.f32.mxu0 0.0
        %769 = vmatmul.mubr.f32.gmra.mxu0 %v610
        %v770 = vpop.f32.mrf.mxu0
        %v771 = vadd.f32 0.0, %v770
        %v772 = vpop.f32.mrf.mxu0
        %773 = vmatprep.mubr.f32.mxu0 0.0
        %774 = vmatmul.mubr.f32.gmra.mxu0 %v615
        %v775 = vpop.f32.mrf.mxu0
        %v776 = vadd.f32 0.0, %v775
        %v777 = vpop.f32.mrf.mxu0
        %778 = vmatprep.mubr.f32.mxu0 0.0
        %779 = vmatmul.mubr.f32.gmra.mxu0 %v620
        %v780 = vpop.f32.mrf.mxu0
        %v781 = vadd.f32 0.0, %v780
        %v782 = vpop.f32.mrf.mxu0
        %783 = vmatprep.mubr.f32.mxu0 0.0
        %784 = vmatmul.mubr.f32.gmra.mxu0 %v625
        %v785 = vpop.f32.mrf.mxu0
        %v786 = vadd.f32 0.0, %v785
        %v787 = vpop.f32.mrf.mxu0
        %788 = vmatprep.mubr.f32.mxu0 0.0
        %789 = vmatmul.mubr.f32.gmra.mxu0 %v630
        %v790 = vpop.f32.mrf.mxu0
        %v791 = vadd.f32 0.0, %v790
        %v792 = vpop.f32.mrf.mxu0
        %793 = vmatprep.mubr.f32.mxu0 0.0
        %794 = vmatmul.mubr.f32.gmra.mxu0 %v635
        %v795 = vpop.f32.mrf.mxu0
        %v796 = vadd.f32 0.0, %v795
        %v797 = vpop.f32.mrf.mxu0
        %798 = vmatprep.mubr.f32.mxu0 0.0
        %799 = vmatmul.mubr.f32.gmra.mxu0 %v640
        %v800 = vpop.f32.mrf.mxu0
        %v801 = vadd.f32 0.0, %v800
        %v802 = vpop.f32.mrf.mxu0
        %803 = vmatprep.mubr.f32.mxu0 0.0
        %804 = vmatmul.mubr.f32.gmra.mxu0 %v645
        %v805 = vpop.f32.mrf.mxu0
        %v806 = vadd.f32 0.0, %v805
        %v807 = vpop.f32.mrf.mxu0
        %808 = vmatprep.mubr.f32.mxu0 0.0
        %809 = vmatmul.mubr.f32.gmra.mxu0 %v650
        %v810 = vpop.f32.mrf.mxu0
        %v811 = vadd.f32 0.0, %v810
        %v812 = vpop.f32.mrf.mxu0
        %813 = vmatprep.mubr.f32.mxu0 0.0
        %814 = vmatmul.mubr.f32.gmra.mxu0 %v655
        %v815 = vpop.f32.mrf.mxu0
        %v816 = vadd.f32 0.0, %v815
        %v817 = vpop.f32.mrf.mxu0
        %818 = vmatprep.mubr.f32.mxu0 0.0
        %819 = vmatmul.mubr.f32.gmra.mxu0 %v660
        %v820 = vpop.f32.mrf.mxu0
        %v821 = vadd.f32 0.0, %v820
        %v822 = vpop.f32.mrf.mxu0
        %823 = vmatprep.mubr.f32.mxu0 0.0
        %824 = vmatmul.mubr.f32.gmra.mxu0 %v665
        %v825 = vpop.f32.mrf.mxu0
        %v826 = vadd.f32 0.0, %v825
        %v827 = vpop.f32.mrf.mxu0
        %828 = vmatprep.mubr.f32.mxu0 0.0
        %829 = vmatmul.mubr.f32.gmra.mxu0 %v670
        %v830 = vpop.f32.mrf.mxu0
        %v831 = vadd.f32 0.0, %v830
        %v832 = vpop.f32.mrf.mxu0
        %833 = vmatprep.mubr.f32.mxu0 0.0
        %834 = vmatmul.mubr.f32.gmra.mxu0 %v675
        %v835 = vpop.f32.mrf.mxu0
        %v836 = vadd.f32 0.0, %v835
        %v837 = vpop.f32.mrf.mxu0
        %838 = vmatprep.mubr.f32.mxu0 0.0
        %839 = vmatmul.mubr.f32.gmra.mxu0 %v680
        %v840 = vpop.f32.mrf.mxu0
        %v841 = vadd.f32 0.0, %v840
        %v842 = vpop.f32.mrf.mxu0
        %843 = vmatprep.mubr.f32.mxu0 0.0
        %844 = vmatmul.mubr.f32.gmra.mxu0 %v685
        %v845 = vpop.f32.mrf.mxu0
        %v846 = vadd.f32 0.0, %v845
        %v847 = vpop.f32.mrf.mxu0
        %848 = vdwg.mxu0
        %v849 = vadd.f32 %v382, %v771
        %v850 = vadd.f32 %v383, %v776
        %v851 = vadd.f32 %v384, %v781
        %v852 = vadd.f32 %v385, %v786
        %v853 = vadd.f32 %v386, %v791
        %v854 = vadd.f32 %v387, %v796
        %v855 = vadd.f32 %v388, %v801
        %v856 = vadd.f32 %v389, %v806
        %v857 = vadd.f32 %v390, %v811
        %v858 = vadd.f32 %v391, %v816
        %v859 = vadd.f32 %v392, %v821
        %v860 = vadd.f32 %v393, %v826
        %v861 = vadd.f32 %v394, %v831
        %v862 = vadd.f32 %v395, %v836
        %v863 = vadd.f32 %v396, %v841
        %v864 = vadd.f32 %v397, %v846
        %v865 = vld [vmem:[%s4] sm:$0x1]
        %v867 = vlaneseq
        %v868 = vshrl.u32 %v867, 7
        %v869 = vsub.s32 0, %v868
        %v870 = vrot.slane %v865, %v869
        %v872 = vadd.f32 %v849, %v870
        %v873 = vadd.f32 %v850, %v870
        %v874 = vadd.f32 %v851, %v870
        %v875 = vadd.f32 %v852, %v870
        %v876 = vadd.f32 %v853, %v870
        %v877 = vadd.f32 %v854, %v870
        %v878 = vadd.f32 %v855, %v870
        %v879 = vadd.f32 %v856, %v870
        %v880 = vadd.f32 %v857, %v870
        %v881 = vadd.f32 %v858, %v870
        %v882 = vadd.f32 %v859, %v870
        %v883 = vadd.f32 %v860, %v870
        %v884 = vadd.f32 %v861, %v870
        %v885 = vadd.f32 %v862, %v870
        %v886 = vadd.f32 %v863, %v870
        %v887 = vadd.f32 %v864, %v870
        %v888 = vld [vmem:[#allocation8] sm:$0xff]
        %v889 = vld [vmem:[#allocation8 + $0x8] sm:$0xff]
        %v890 = vld [vmem:[#allocation8 + $0x10] sm:$0xff]
        %v891 = vld [vmem:[#allocation8 + $0x18] sm:$0xff]
        %v892 = vld [vmem:[#allocation8 + $0x20] sm:$0xff]
        %v893 = vld [vmem:[#allocation8 + $0x28] sm:$0xff]
        %v894 = vld [vmem:[#allocation8 + $0x30] sm:$0xff]
        %v895 = vld [vmem:[#allocation8 + $0x38] sm:$0xff]
        %v896 = vld [vmem:[#allocation8 + $0x40] sm:$0xff]
        %v897 = vld [vmem:[#allocation8 + $0x48] sm:$0xff]
        %v898 = vld [vmem:[#allocation8 + $0x50] sm:$0xff]
        %v899 = vld [vmem:[#allocation8 + $0x58] sm:$0xff]
        %v900 = vld [vmem:[#allocation8 + $0x60] sm:$0xff]
        %v901 = vld [vmem:[#allocation8 + $0x68] sm:$0xff]
        %v902 = vld [vmem:[#allocation8 + $0x70] sm:$0xff]
        %v903 = vld [vmem:[#allocation8 + $0x78] sm:$0xff]
        %904 = vmatprep.subr.mxu0 0.0
        %905 = vmatpush1.msra.mxu0 %v903
        %906 = vmatprep.subr.mxu0 0.0
        %907 = vmatpush1.msra.mxu0 %v902
        %908 = vmatprep.subr.mxu0 0.0
        %909 = vmatpush1.msra.mxu0 %v901
        %910 = vmatprep.subr.mxu0 0.0
        %911 = vmatpush1.msra.mxu0 %v900
        %912 = vmatprep.subr.mxu0 0.0
        %913 = vmatpush1.msra.mxu0 %v899
        %914 = vmatprep.subr.mxu0 0.0
        %915 = vmatpush1.msra.mxu0 %v898
        %916 = vmatprep.subr.mxu0 0.0
        %917 = vmatpush1.msra.mxu0 %v897
        %918 = vmatprep.subr.mxu0 0.0
        %919 = vmatpush1.msra.mxu0 %v896
        %920 = vmatprep.subr.mxu0 0.0
        %921 = vmatpush1.msra.mxu0 %v895
        %922 = vmatprep.subr.mxu0 0.0
        %923 = vmatpush1.msra.mxu0 %v894
        %924 = vmatprep.subr.mxu0 0.0
        %925 = vmatpush1.msra.mxu0 %v893
        %926 = vmatprep.subr.mxu0 0.0
        %927 = vmatpush1.msra.mxu0 %v892
        %928 = vmatprep.subr.mxu0 0.0
        %929 = vmatpush1.msra.mxu0 %v891
        %930 = vmatprep.subr.mxu0 0.0
        %931 = vmatpush1.msra.mxu0 %v890
        %932 = vmatprep.subr.mxu0 0.0
        %933 = vmatpush1.msra.mxu0 %v889
        %934 = vmatprep.subr.mxu0 0.0
        %935 = vmatpush1.msra.mxu0 %v888
        %936 = vmatprep.subr.mxu0 0.0
        %937 = vmatpush2.msra.mxu0 0.0
        %938 = vmatprep.subr.mxu0 0.0
        %939 = vmatpush2.msra.mxu0 0.0
        %940 = vmatprep.subr.mxu0 0.0
        %941 = vmatpush2.msra.mxu0 0.0
        %942 = vmatprep.subr.mxu0 0.0
        %943 = vmatpush2.msra.mxu0 0.0
        %944 = vmatprep.subr.mxu0 0.0
        %945 = vmatpush2.msra.mxu0 0.0
        %946 = vmatprep.subr.mxu0 0.0
        %947 = vmatpush2.msra.mxu0 0.0
        %948 = vmatprep.subr.mxu0 0.0
        %949 = vmatpush2.msra.mxu0 0.0
        %950 = vmatprep.subr.mxu0 0.0
        %951 = vmatpush2.msra.mxu0 0.0
        %952 = vmatprep.subr.mxu0 0.0
        %953 = vmatpush2.msra.mxu0 0.0
        %954 = vmatprep.subr.mxu0 0.0
        %955 = vmatpush2.msra.mxu0 0.0
        %956 = vmatprep.subr.mxu0 0.0
        %957 = vmatpush2.msra.mxu0 0.0
        %958 = vmatprep.subr.mxu0 0.0
        %959 = vmatpush2.msra.mxu0 0.0
        %960 = vmatprep.subr.mxu0 0.0
        %961 = vmatpush2.msra.mxu0 0.0
        %962 = vmatprep.subr.mxu0 0.0
        %963 = vmatpush2.msra.mxu0 0.0
        %964 = vmatprep.subr.mxu0 0.0
        %965 = vmatpush2.msra.mxu0 0.0
        %966 = vmatprep.subr.mxu0 0.0
        %967 = vmatpush2.msra.mxu0 0.0
        %968 = vmatprep.mubr.f32.mxu0 0.0
        %969 = vmatmul.mubr.f32.gmra.mxu0 %v872
        %v970 = vpop.f32.mrf.mxu0
        %v971 = vadd.f32 0.0, %v970
        %v972 = vpop.f32.mrf.mxu0
        %973 = vmatprep.mubr.f32.mxu0 0.0
        %974 = vmatmul.mubr.f32.gmra.mxu0 %v873
        %v975 = vpop.f32.mrf.mxu0
        %v976 = vadd.f32 0.0, %v975
        %v977 = vpop.f32.mrf.mxu0
        %978 = vmatprep.mubr.f32.mxu0 0.0
        %979 = vmatmul.mubr.f32.gmra.mxu0 %v874
        %v980 = vpop.f32.mrf.mxu0
        %v981 = vadd.f32 0.0, %v980
        %v982 = vpop.f32.mrf.mxu0
        %983 = vmatprep.mubr.f32.mxu0 0.0
        %984 = vmatmul.mubr.f32.gmra.mxu0 %v875
        %v985 = vpop.f32.mrf.mxu0
        %v986 = vadd.f32 0.0, %v985
        %v987 = vpop.f32.mrf.mxu0
        %988 = vmatprep.mubr.f32.mxu0 0.0
        %989 = vmatmul.mubr.f32.gmra.mxu0 %v876
        %v990 = vpop.f32.mrf.mxu0
        %v991 = vadd.f32 0.0, %v990
        %v992 = vpop.f32.mrf.mxu0
        %993 = vmatprep.mubr.f32.mxu0 0.0
        %994 = vmatmul.mubr.f32.gmra.mxu0 %v877
        %v995 = vpop.f32.mrf.mxu0
        %v996 = vadd.f32 0.0, %v995
        %v997 = vpop.f32.mrf.mxu0
        %998 = vmatprep.mubr.f32.mxu0 0.0
        %999 = vmatmul.mubr.f32.gmra.mxu0 %v878
        %v1000 = vpop.f32.mrf.mxu0
        %v1001 = vadd.f32 0.0, %v1000
        %v1002 = vpop.f32.mrf.mxu0
        %1003 = vmatprep.mubr.f32.mxu0 0.0
        %1004 = vmatmul.mubr.f32.gmra.mxu0 %v879
        %v1005 = vpop.f32.mrf.mxu0
        %v1006 = vadd.f32 0.0, %v1005
        %v1007 = vpop.f32.mrf.mxu0
        %1008 = vmatprep.mubr.f32.mxu0 0.0
        %1009 = vmatmul.mubr.f32.gmra.mxu0 %v880
        %v1010 = vpop.f32.mrf.mxu0
        %v1011 = vadd.f32 0.0, %v1010
        %v1012 = vpop.f32.mrf.mxu0
        %1013 = vmatprep.mubr.f32.mxu0 0.0
        %1014 = vmatmul.mubr.f32.gmra.mxu0 %v881
        %v1015 = vpop.f32.mrf.mxu0
        %v1016 = vadd.f32 0.0, %v1015
        %v1017 = vpop.f32.mrf.mxu0
        %1018 = vmatprep.mubr.f32.mxu0 0.0
        %1019 = vmatmul.mubr.f32.gmra.mxu0 %v882
        %v1020 = vpop.f32.mrf.mxu0
        %v1021 = vadd.f32 0.0, %v1020
        %v1022 = vpop.f32.mrf.mxu0
        %1023 = vmatprep.mubr.f32.mxu0 0.0
        %1024 = vmatmul.mubr.f32.gmra.mxu0 %v883
        %v1025 = vpop.f32.mrf.mxu0
        %v1026 = vadd.f32 0.0, %v1025
        %v1027 = vpop.f32.mrf.mxu0
        %1028 = vmatprep.mubr.f32.mxu0 0.0
        %1029 = vmatmul.mubr.f32.gmra.mxu0 %v884
        %v1030 = vpop.f32.mrf.mxu0
        %v1031 = vadd.f32 0.0, %v1030
        %v1032 = vpop.f32.mrf.mxu0
        %1033 = vmatprep.mubr.f32.mxu0 0.0
        %1034 = vmatmul.mubr.f32.gmra.mxu0 %v885
        %v1035 = vpop.f32.mrf.mxu0
        %v1036 = vadd.f32 0.0, %v1035
        %v1037 = vpop.f32.mrf.mxu0
        %1038 = vmatprep.mubr.f32.mxu0 0.0
        %1039 = vmatmul.mubr.f32.gmra.mxu0 %v886
        %v1040 = vpop.f32.mrf.mxu0
        %v1041 = vadd.f32 0.0, %v1040
        %v1042 = vpop.f32.mrf.mxu0
        %1043 = vmatprep.mubr.f32.mxu0 0.0
        %1044 = vmatmul.mubr.f32.gmra.mxu0 %v887
        %v1045 = vpop.f32.mrf.mxu0
        %v1046 = vadd.f32 0.0, %v1045
        %v1047 = vpop.f32.mrf.mxu0
        %1048 = vdwg.mxu0
        %v1049 = vsub.f32 %v872, %v971
        %v1050 = vsub.f32 %v873, %v976
        %v1051 = vsub.f32 %v874, %v981
        %v1052 = vsub.f32 %v875, %v986
        %v1053 = vsub.f32 %v876, %v991
        %v1054 = vsub.f32 %v877, %v996
        %v1055 = vsub.f32 %v878, %v1001
        %v1056 = vsub.f32 %v879, %v1006
        %v1057 = vsub.f32 %v880, %v1011
        %v1058 = vsub.f32 %v881, %v1016
        %v1059 = vsub.f32 %v882, %v1021
        %v1060 = vsub.f32 %v883, %v1026
        %v1061 = vsub.f32 %v884, %v1031
        %v1062 = vsub.f32 %v885, %v1036
        %v1063 = vsub.f32 %v886, %v1041
        %v1064 = vsub.f32 %v887, %v1046
        %v1065 = vmul.f32 %v1049, %v1049
        %v1066 = vmul.f32 %v1050, %v1050
        %v1067 = vmul.f32 %v1051, %v1051
        %v1068 = vmul.f32 %v1052, %v1052
        %v1069 = vmul.f32 %v1053, %v1053
        %v1070 = vmul.f32 %v1054, %v1054
        %v1071 = vmul.f32 %v1055, %v1055
        %v1072 = vmul.f32 %v1056, %v1056
        %v1073 = vmul.f32 %v1057, %v1057
        %v1074 = vmul.f32 %v1058, %v1058
        %v1075 = vmul.f32 %v1059, %v1059
        %v1076 = vmul.f32 %v1060, %v1060
        %v1077 = vmul.f32 %v1061, %v1061
        %v1078 = vmul.f32 %v1062, %v1062
        %v1079 = vmul.f32 %v1063, %v1063
        %v1080 = vmul.f32 %v1064, %v1064
        %1081 = vmatprep.subr.mxu0 0.0
        %1082 = vmatpush1.msra.mxu0 %v903
        %1083 = vmatprep.subr.mxu0 0.0
        %1084 = vmatpush1.msra.mxu0 %v902
        %1085 = vmatprep.subr.mxu0 0.0
        %1086 = vmatpush1.msra.mxu0 %v901
        %1087 = vmatprep.subr.mxu0 0.0
        %1088 = vmatpush1.msra.mxu0 %v900
        %1089 = vmatprep.subr.mxu0 0.0
        %1090 = vmatpush1.msra.mxu0 %v899
        %1091 = vmatprep.subr.mxu0 0.0
        %1092 = vmatpush1.msra.mxu0 %v898
        %1093 = vmatprep.subr.mxu0 0.0
        %1094 = vmatpush1.msra.mxu0 %v897
        %1095 = vmatprep.subr.mxu0 0.0
        %1096 = vmatpush1.msra.mxu0 %v896
        %1097 = vmatprep.subr.mxu0 0.0
        %1098 = vmatpush1.msra.mxu0 %v895
        %1099 = vmatprep.subr.mxu0 0.0
        %1100 = vmatpush1.msra.mxu0 %v894
        %1101 = vmatprep.subr.mxu0 0.0
        %1102 = vmatpush1.msra.mxu0 %v893
        %1103 = vmatprep.subr.mxu0 0.0
        %1104 = vmatpush1.msra.mxu0 %v892
        %1105 = vmatprep.subr.mxu0 0.0
        %1106 = vmatpush1.msra.mxu0 %v891
        %1107 = vmatprep.subr.mxu0 0.0
        %1108 = vmatpush1.msra.mxu0 %v890
        %1109 = vmatprep.subr.mxu0 0.0
        %1110 = vmatpush1.msra.mxu0 %v889
        %1111 = vmatprep.subr.mxu0 0.0
        %1112 = vmatpush1.msra.mxu0 %v888
        %1113 = vmatprep.subr.mxu0 0.0
        %1114 = vmatpush2.msra.mxu0 0.0
        %1115 = vmatprep.subr.mxu0 0.0
        %1116 = vmatpush2.msra.mxu0 0.0
        %1117 = vmatprep.subr.mxu0 0.0
        %1118 = vmatpush2.msra.mxu0 0.0
        %1119 = vmatprep.subr.mxu0 0.0
        %1120 = vmatpush2.msra.mxu0 0.0
        %1121 = vmatprep.subr.mxu0 0.0
        %1122 = vmatpush2.msra.mxu0 0.0
        %1123 = vmatprep.subr.mxu0 0.0
        %1124 = vmatpush2.msra.mxu0 0.0
        %1125 = vmatprep.subr.mxu0 0.0
        %1126 = vmatpush2.msra.mxu0 0.0
        %1127 = vmatprep.subr.mxu0 0.0
        %1128 = vmatpush2.msra.mxu0 0.0
        %1129 = vmatprep.subr.mxu0 0.0
        %1130 = vmatpush2.msra.mxu0 0.0
        %1131 = vmatprep.subr.mxu0 0.0
        %1132 = vmatpush2.msra.mxu0 0.0
        %1133 = vmatprep.subr.mxu0 0.0
        %1134 = vmatpush2.msra.mxu0 0.0
        %1135 = vmatprep.subr.mxu0 0.0
        %1136 = vmatpush2.msra.mxu0 0.0
        %1137 = vmatprep.subr.mxu0 0.0
        %1138 = vmatpush2.msra.mxu0 0.0
        %1139 = vmatprep.subr.mxu0 0.0
        %1140 = vmatpush2.msra.mxu0 0.0
        %1141 = vmatprep.subr.mxu0 0.0
        %1142 = vmatpush2.msra.mxu0 0.0
        %1143 = vmatprep.subr.mxu0 0.0
        %1144 = vmatpush2.msra.mxu0 0.0
        %1145 = vmatprep.mubr.f32.mxu0 0.0
        %1146 = vmatmul.mubr.f32.gmra.mxu0 %v1065
        %v1147 = vpop.f32.mrf.mxu0
        %v1148 = vadd.f32 1e-05, %v1147
        %v1149 = vpop.f32.mrf.mxu0
        %1150 = vmatprep.mubr.f32.mxu0 0.0
        %1151 = vmatmul.mubr.f32.gmra.mxu0 %v1066
        %v1152 = vpop.f32.mrf.mxu0
        %v1153 = vadd.f32 1e-05, %v1152
        %v1154 = vpop.f32.mrf.mxu0
        %1155 = vmatprep.mubr.f32.mxu0 0.0
        %1156 = vmatmul.mubr.f32.gmra.mxu0 %v1067
        %v1157 = vpop.f32.mrf.mxu0
        %v1158 = vadd.f32 1e-05, %v1157
        %v1159 = vpop.f32.mrf.mxu0
        %1160 = vmatprep.mubr.f32.mxu0 0.0
        %1161 = vmatmul.mubr.f32.gmra.mxu0 %v1068
        %v1162 = vpop.f32.mrf.mxu0
        %v1163 = vadd.f32 1e-05, %v1162
        %v1164 = vpop.f32.mrf.mxu0
        %1165 = vmatprep.mubr.f32.mxu0 0.0
        %1166 = vmatmul.mubr.f32.gmra.mxu0 %v1069
        %v1167 = vpop.f32.mrf.mxu0
        %v1168 = vadd.f32 1e-05, %v1167
        %v1169 = vpop.f32.mrf.mxu0
        %1170 = vmatprep.mubr.f32.mxu0 0.0
        %1171 = vmatmul.mubr.f32.gmra.mxu0 %v1070
        %v1172 = vpop.f32.mrf.mxu0
        %v1173 = vadd.f32 1e-05, %v1172
        %v1174 = vpop.f32.mrf.mxu0
        %1175 = vmatprep.mubr.f32.mxu0 0.0
        %1176 = vmatmul.mubr.f32.gmra.mxu0 %v1071
        %v1177 = vpop.f32.mrf.mxu0
        %v1178 = vadd.f32 1e-05, %v1177
        %v1179 = vpop.f32.mrf.mxu0
        %1180 = vmatprep.mubr.f32.mxu0 0.0
        %1181 = vmatmul.mubr.f32.gmra.mxu0 %v1072
        %v1182 = vpop.f32.mrf.mxu0
        %v1183 = vadd.f32 1e-05, %v1182
        %v1184 = vpop.f32.mrf.mxu0
        %1185 = vmatprep.mubr.f32.mxu0 0.0
        %1186 = vmatmul.mubr.f32.gmra.mxu0 %v1073
        %v1187 = vpop.f32.mrf.mxu0
        %v1188 = vadd.f32 1e-05, %v1187
        %v1189 = vpop.f32.mrf.mxu0
        %1190 = vmatprep.mubr.f32.mxu0 0.0
        %1191 = vmatmul.mubr.f32.gmra.mxu0 %v1074
        %v1192 = vpop.f32.mrf.mxu0
        %v1193 = vadd.f32 1e-05, %v1192
        %v1194 = vpop.f32.mrf.mxu0
        %1195 = vmatprep.mubr.f32.mxu0 0.0
        %1196 = vmatmul.mubr.f32.gmra.mxu0 %v1075
        %v1197 = vpop.f32.mrf.mxu0
        %v1198 = vadd.f32 1e-05, %v1197
        %v1199 = vpop.f32.mrf.mxu0
        %1200 = vmatprep.mubr.f32.mxu0 0.0
        %1201 = vmatmul.mubr.f32.gmra.mxu0 %v1076
        %v1202 = vpop.f32.mrf.mxu0
        %v1203 = vadd.f32 1e-05, %v1202
        %v1204 = vpop.f32.mrf.mxu0
        %1205 = vmatprep.mubr.f32.mxu0 0.0
        %1206 = vmatmul.mubr.f32.gmra.mxu0 %v1077
        %v1207 = vpop.f32.mrf.mxu0
        %v1208 = vadd.f32 1e-05, %v1207
        %v1209 = vpop.f32.mrf.mxu0
        %1210 = vmatprep.mubr.f32.mxu0 0.0
        %1211 = vmatmul.mubr.f32.gmra.mxu0 %v1078
        %v1212 = vpop.f32.mrf.mxu0
        %v1213 = vadd.f32 1e-05, %v1212
        %v1214 = vpop.f32.mrf.mxu0
        %1215 = vmatprep.mubr.f32.mxu0 0.0
        %1216 = vmatmul.mubr.f32.gmra.mxu0 %v1079
        %v1217 = vpop.f32.mrf.mxu0
        %v1218 = vadd.f32 1e-05, %v1217
        %v1219 = vpop.f32.mrf.mxu0
        %1220 = vmatprep.mubr.f32.mxu0 0.0
        %1221 = vmatmul.mubr.f32.gmra.mxu0 %v1080
        %v1222 = vpop.f32.mrf.mxu0
        %v1223 = vadd.f32 1e-05, %v1222
        %v1224 = vpop.f32.mrf.mxu0
        %1225 = vdwg.mxu0
        %v1226 = vrsqrt.pop %v1148
        %v1227 = vrsqrt.pop %v1153
        %v1228 = vrsqrt.pop %v1158
        %v1229 = vrsqrt.pop %v1163
        %v1230 = vrsqrt.pop %v1168
        %v1231 = vrsqrt.pop %v1173
        %v1232 = vrsqrt.pop %v1178
        %v1233 = vrsqrt.pop %v1183
        %v1234 = vrsqrt.pop %v1188
        %v1235 = vrsqrt.pop %v1193
        %v1236 = vrsqrt.pop %v1198
        %v1237 = vrsqrt.pop %v1203
        %v1238 = vrsqrt.pop %v1208
        %v1239 = vrsqrt.pop %v1213
        %v1240 = vrsqrt.pop %v1218
        %v1241 = vrsqrt.pop %v1223
        %v1242 = vmul.f32 %v1049, %v1226
        %v1243 = vmul.f32 %v1050, %v1227
        %v1244 = vmul.f32 %v1051, %v1228
        %v1245 = vmul.f32 %v1052, %v1229
        %v1246 = vmul.f32 %v1053, %v1230
        %v1247 = vmul.f32 %v1054, %v1231
        %v1248 = vmul.f32 %v1055, %v1232
        %v1249 = vmul.f32 %v1056, %v1233
        %v1250 = vmul.f32 %v1057, %v1234
        %v1251 = vmul.f32 %v1058, %v1235
        %v1252 = vmul.f32 %v1059, %v1236
        %v1253 = vmul.f32 %v1060, %v1237
        %v1254 = vmul.f32 %v1061, %v1238
        %v1255 = vmul.f32 %v1062, %v1239
        %v1256 = vmul.f32 %v1063, %v1240
        %v1257 = vmul.f32 %v1064, %v1241
        %v1258 = vld [vmem:[%s5] sm:$0x1]
        %v1260 = vlaneseq
        %v1261 = vshrl.u32 %v1260, 7
        %v1262 = vsub.s32 0, %v1261
        %v1263 = vrot.slane %v1258, %v1262
        %v1265 = vmul.f32 %v1242, %v1263
        %v1266 = vmul.f32 %v1243, %v1263
        %v1267 = vmul.f32 %v1244, %v1263
        %v1268 = vmul.f32 %v1245, %v1263
        %v1269 = vmul.f32 %v1246, %v1263
        %v1270 = vmul.f32 %v1247, %v1263
        %v1271 = vmul.f32 %v1248, %v1263
        %v1272 = vmul.f32 %v1249, %v1263
        %v1273 = vmul.f32 %v1250, %v1263
        %v1274 = vmul.f32 %v1251, %v1263
        %v1275 = vmul.f32 %v1252, %v1263
        %v1276 = vmul.f32 %v1253, %v1263
        %v1277 = vmul.f32 %v1254, %v1263
        %v1278 = vmul.f32 %v1255, %v1263
        %v1279 = vmul.f32 %v1256, %v1263
        %v1280 = vmul.f32 %v1257, %v1263
        %v1281 = vld [vmem:[%s6] sm:$0x1]
        %v1283 = vlaneseq
        %v1284 = vshrl.u32 %v1283, 7
        %v1285 = vsub.s32 0, %v1284
        %v1286 = vrot.slane %v1281, %v1285
        %v1288 = vadd.f32 %v1265, %v1286
        %v1289 = vadd.f32 %v1266, %v1286
        %v1290 = vadd.f32 %v1267, %v1286
        %v1291 = vadd.f32 %v1268, %v1286
        %v1292 = vadd.f32 %v1269, %v1286
        %v1293 = vadd.f32 %v1270, %v1286
        %v1294 = vadd.f32 %v1271, %v1286
        %v1295 = vadd.f32 %v1272, %v1286
        %v1296 = vadd.f32 %v1273, %v1286
        %v1297 = vadd.f32 %v1274, %v1286
        %v1298 = vadd.f32 %v1275, %v1286
        %v1299 = vadd.f32 %v1276, %v1286
        %v1300 = vadd.f32 %v1277, %v1286
        %v1301 = vadd.f32 %v1278, %v1286
        %v1302 = vadd.f32 %v1279, %v1286
        %v1303 = vadd.f32 %v1280, %v1286
        %1304 = vst [vmem:[%s365] sm:$0xff] %v1288
        %1305 = vst [vmem:[%s365 + $0x8] sm:$0xff] %v1289
        %1306 = vst [vmem:[%s365 + $0x10] sm:$0xff] %v1290
        %1307 = vst [vmem:[%s365 + $0x18] sm:$0xff] %v1291
        %1308 = vst [vmem:[%s365 + $0x20] sm:$0xff] %v1292
        %1309 = vst [vmem:[%s365 + $0x28] sm:$0xff] %v1293
        %1310 = vst [vmem:[%s365 + $0x30] sm:$0xff] %v1294
        %1311 = vst [vmem:[%s365 + $0x38] sm:$0xff] %v1295
        %1312 = vst [vmem:[%s365 + $0x40] sm:$0xff] %v1296
        %1313 = vst [vmem:[%s365 + $0x48] sm:$0xff] %v1297
        %1314 = vst [vmem:[%s365 + $0x50] sm:$0xff] %v1298
        %1315 = vst [vmem:[%s365 + $0x58] sm:$0xff] %v1299
        %1316 = vst [vmem:[%s365 + $0x60] sm:$0xff] %v1300
        %1317 = vst [vmem:[%s365 + $0x68] sm:$0xff] %v1301
        %1318 = vst [vmem:[%s365 + $0x70] sm:$0xff] %v1302
        %1319 = vst [vmem:[%s365 + $0x78] sm:$0xff] %v1303
        %s1320 = sand.u32 %s193, 1
        %s1321 = scalar_lea.sflag [#allocation4], %s1320
        %s1322 = sand.u32 %s193, 1
        %s1323 = smul.addr %s1322, 128
        %s1324 = scalar_lea.vmem [#allocation10], %s1323
        // Predicated region
        $region65: #{tpu_custom_call.1} parent=47 // pred_check
          %p1325 = pneg %p203
        $region66: #{tpu_custom_call.1} parent=47 // pred_check_branch
          %1327 = sbr.rel (%p1325) target = $region68
        $region67: #{tpu_custom_call.1} parent=47 // pred_region
          %s1329 = ssub.s32 2048, 2048
          %1330 = vsyncadd %s1321, %s1329
          %s1331 = smul.addr %s28, 16
          %s1332 = smul.addr %s1331, 128
          %s1333 = scalar_lea.hbm %s7, %s1332
          %s1334 = sshll.u32 %s1324, 4
          %s1335 = int_to_ptr.vmem [resolvable:$true] %s1334
          %1340 = dma.vmem_to_hbm [thread:$0]  %s1335, 2048, %s1333, %s1321, 128, 128, 8
        $region68: #{tpu_custom_call.1} parent=47 // pred_fallthru
          _
      $region48: #{tpu_custom_call.1} parent=5 // pred_fallthru
        _
      %p1341 = scmp.le.s32.totalorder 2, %s23
      // Predicated region
      $region69: #{tpu_custom_call.1} parent=5 // pred_check
        %p1342 = pneg %p1341
      $region70: #{tpu_custom_call.1} parent=5 // pred_check_branch
        %1344 = sbr.rel (%p1342) target = $region72
      $region71: #{tpu_custom_call.1} parent=5 // pred_region
        %s1345 = ssub.s32 %s23, 2
        // Predicated region
        $region73: #{tpu_custom_call.1} parent=71 // pred_check
          %p1346 = pneg %p209
        $region74: #{tpu_custom_call.1} parent=71 // pred_check_branch
          %1348 = sbr.rel (%p1346) target = $region76
        $region75: #{tpu_custom_call.1} parent=71 // pred_region
          %s1349 = sand.u32 %s194, 1
          %s1350 = scalar_lea.sflag [#allocation4], %s1349
          %s1351 = sand.u32 %s194, 1
          %s1352 = smul.addr %s1351, 128
          %s1353 = scalar_lea.vmem [#allocation10], %s1352
          %1354 = dma.done %s1350, 2048
        $region76: #{tpu_custom_call.1} parent=71 // pred_fallthru
          _
      $region72: #{tpu_custom_call.1} parent=5 // pred_fallthru
        _
    $region6: #{tpu_custom_call.1} parent=1 // loop_footer
      %s27 = sadd.s32 1, %s23
    $region7: #{tpu_custom_call.1} parent=1 // loop_footer_branch
      %22 = sbr.rel target = $region3
    $region8: #{tpu_custom_call.1} parent=1 // loop_exit
      _
    %1355 = vsyncpa [#allocation3], 1
    %s1356 = scalar_lea.sflag [#allocation3], 1
    %1357 = vsyncpa %s1356, 1
    %1358 = vsyncpa [#allocation6], 1
    %s1359 = scalar_lea.sflag [#allocation6], 1
    %1360 = vsyncpa %s1359, 1
    %1361 = vsyncpa [#allocation9], 1
    %1362 = vsyncpa [#allocation4], 1
    %s1363 = scalar_lea.sflag [#allocation4], 1
    %1364 = vsyncpa %s1363, 1

</llo_original>
